<compile_context>
chip_gen: v7x
topology: tpu7x:2x2x1
jax: 0.10.0
libtpu: 0.0.40
codegen_flags: <defaults>
</compile_context>

<pallas_src>
import functools
import math

import jax
import jax.numpy as jnp
from jax import lax
from jax.experimental import pallas as pl
from jax.experimental.pallas import tpu as pltpu


# A (M, K) x B (N, K) -> (M, N): contract the last dims, no batch dims.
_NT_DIMS = (((1,), (1,)), ((), ()))


def _layer_norm(x, gamma, beta, eps=1e-5):
    # x: (S, D) f32, gamma/beta: (1, D) f32 — statistics kept in f32.
    mu = jnp.mean(x, axis=-1, keepdims=True)
    xc = x - mu
    var = jnp.mean(xc * xc, axis=-1, keepdims=True)
    return xc * lax.rsqrt(var + eps) * gamma + beta


def _block_kernel(n_head,
                  x_ref,
                  ln1_g_ref, ln1_b_ref,
                  wq_ref, wk_ref, wv_ref,
                  bq_ref, bk_ref, bv_ref,
                  wo_ref, bo_ref,
                  ln2_g_ref, ln2_b_ref,
                  wfc_ref, bfc_ref,
                  wproj_ref, bproj_ref,
                  o_ref):
    x = x_ref[0]                                   # (S, D) f32
    S, D = x.shape
    hd = D // n_head
    scale = 1.0 / math.sqrt(hd)

    # ---- attention branch: x + MHA(LN1(x)) ----
    h = _layer_norm(x, ln1_g_ref[...], ln1_b_ref[...])
    hb = h.astype(jnp.bfloat16)

    # Full-width projections on the MXU, f32 accumulation, biases added once.
    q = jnp.dot(hb, wq_ref[...], preferred_element_type=jnp.float32) + bq_ref[...]
    k = jnp.dot(hb, wk_ref[...], preferred_element_type=jnp.float32) + bk_ref[...]
    v = jnp.dot(hb, wv_ref[...], preferred_element_type=jnp.float32) + bv_ref[...]

    # Fold the 1/sqrt(hd) scale into q, then cast attention operands to bf16 once.
    qb = (q * scale).astype(jnp.bfloat16)
    kb = k.astype(jnp.bfloat16)
    vb = v.astype(jnp.bfloat16)

    head_outs = []
    for hh in range(n_head):
        sl = slice(hh * hd, (hh + 1) * hd)
        qh, kh, vh = qb[:, sl], kb[:, sl], vb[:, sl]        # (S, hd) bf16
        # q @ k^T without materializing a transpose: contract the last dims.
        s = lax.dot_general(qh, kh, _NT_DIMS,
                            preferred_element_type=jnp.float32)      # (S, S) f32
        s = s - jnp.max(s, axis=-1, keepdims=True)
        e = jnp.exp(s)
        p = e * pl.reciprocal(jnp.sum(e, axis=-1, keepdims=True), approx=True)
        head_outs.append(jnp.dot(p.astype(jnp.bfloat16), vh,
                                 preferred_element_type=jnp.float32))  # (S, hd) f32
    attn = jnp.concatenate(head_outs, axis=-1)                         # (S, D) f32
    attn = (jnp.dot(attn.astype(jnp.bfloat16), wo_ref[...],
                    preferred_element_type=jnp.float32) + bo_ref[...])

    x1 = x + attn

    # ---- MLP branch: x1 + c_proj(QuickGELU(c_fc(LN2(x1)))) ----
    h2 = _layer_norm(x1, ln2_g_ref[...], ln2_b_ref[...]).astype(jnp.bfloat16)
    f = jnp.dot(h2, wfc_ref[...], preferred_element_type=jnp.float32) + bfc_ref[...]
    f = f * jax.nn.sigmoid(1.702 * f)                                  # QuickGELU (f32)
    m = (jnp.dot(f.astype(jnp.bfloat16), wproj_ref[...],
                 preferred_element_type=jnp.float32) + bproj_ref[...])

    o_ref[0] = (x1 + m).astype(o_ref.dtype)


def residual_attention_block(x_sbd, params, n_head):
    """x_sbd: (S, B, D) float32 — same layout as the PyTorch module."""
    S, B, D = x_sbd.shape
    assert D % n_head == 0, "d_model must be divisible by n_head"

    x = jnp.transpose(x_sbd, (1, 0, 2))                                # (B, S, D)

    (ln1_g, ln1_b, wq, wk, wv, bq, bk, bv, wo, bo,
     ln2_g, ln2_b, wfc, bfc, wproj, bproj) = params

    # Weights feed the MXU in bf16 (f32 accumulation happens in-kernel); this
    # halves the resident weight VMEM.  Biases / LN params stay f32.
    bf16 = jnp.bfloat16
    wq = wq.astype(bf16); wk = wk.astype(bf16); wv = wv.astype(bf16)
    wo = wo.astype(bf16); wfc = wfc.astype(bf16); wproj = wproj.astype(bf16)

    def resident(a):
        # Whole-array block with a constant index map: DMA'd once, reused across
        # the batch grid.
        return pl.BlockSpec(a.shape, lambda b, _nd=a.ndim: (0,) * _nd)

    in_specs = [
        pl.BlockSpec((1, S, D), lambda b: (b, 0, 0)),                  # x
        resident(ln1_g), resident(ln1_b),
        resident(wq), resident(wk), resident(wv),
        resident(bq), resident(bk), resident(bv),
        resident(wo), resident(bo),
        resident(ln2_g), resident(ln2_b),
        resident(wfc), resident(bfc),
        resident(wproj), resident(bproj),
    ]

    # --- cost estimate (helps XLA schedule around this large custom call) ---
    flops = B * (24 * S * D * D + 4 * S * S * D)
    transcendentals = B * (n_head * S * S + 4 * S * D)
    weight_bytes = sum(int(a.size) * a.dtype.itemsize for a in
                       (wq, wk, wv, wo, wfc, wproj,
                        ln1_g, ln1_b, bq, bk, bv, bo, ln2_g, ln2_b, bfc, bproj))
    bytes_accessed = weight_bytes + 2 * B * S * D * 4
    cost = pl.CostEstimate(flops=int(flops),
                           transcendentals=int(transcendentals),
                           bytes_accessed=int(bytes_accessed))

    # --- explicit VMEM budget: double-buffered weights + x/out blocks + acts ---
    est = (2 * weight_bytes                      # pipeline-buffered weights
           + 4 * (S * D * 4)                     # x / out blocks (double-buffered)
           + 16 * (S * D * 4)                    # q/k/v/attn/x1 intermediates
           + 8 * (S * 4 * D * 4))                # MLP hidden intermediates
    vmem_limit = int(min(64 * 2 ** 20, max(4 * est, 16 * 2 ** 20)))

    out = pl.pallas_call(
        functools.partial(_block_kernel, n_head),
        out_shape=jax.ShapeDtypeStruct((B, S, D), jnp.float32),
        grid_spec=pltpu.PrefetchScalarGridSpec(
            num_scalar_prefetch=0,
            grid=(B,),
            in_specs=in_specs,
            out_specs=pl.BlockSpec((1, S, D), lambda b: (b, 0, 0)),
        ),
        compiler_params=pltpu.CompilerParams(
            dimension_semantics=("parallel",),
            vmem_limit_bytes=vmem_limit),
        cost_estimate=cost,
    )(x, ln1_g, ln1_b, wq, wk, wv, bq, bk, bv, wo, bo,
      ln2_g, ln2_b, wfc, bfc, wproj, bproj)

    return jnp.transpose(out, (1, 0, 2))                               # (S, B, D)


def ref_block(x_sbd, params, n_head):
    """Pure-JAX f32 reference mirroring the PyTorch forward."""
    (ln1_g, ln1_b, wq, wk, wv, bq, bk, bv, wo, bo,
     ln2_g, ln2_b, wfc, bfc, wproj, bproj) = params
    x = jnp.transpose(x_sbd, (1, 0, 2))                                # (B, S, D)
    B, S, D = x.shape
    hd = D // n_head
    scale = 1.0 / math.sqrt(hd)

    def ln(y, g, b, eps=1e-5):
        mu = jnp.mean(y, axis=-1, keepdims=True)
        var = jnp.mean((y - mu) ** 2, axis=-1, keepdims=True)
        return (y - mu) / jnp.sqrt(var + eps) * g + b

    h = ln(x, ln1_g, ln1_b)
    q = h @ wq + bq
    k = h @ wk + bk
    v = h @ wv + bv
    q = q.reshape(B, S, n_head, hd).transpose(0, 2, 1, 3)
    k = k.reshape(B, S, n_head, hd).transpose(0, 2, 1, 3)
    v = v.reshape(B, S, n_head, hd).transpose(0, 2, 1, 3)
    s = jnp.einsum("bhqd,bhkd->bhqk", q, k) * scale
    p = jax.nn.softmax(s, axis=-1)
    a = jnp.einsum("bhqk,bhkd->bhqd", p, v).transpose(0, 2, 1, 3).reshape(B, S, D)
    a = a @ wo + bo
    x1 = x + a

    h2 = ln(x1, ln2_g, ln2_b)
    f = h2 @ wfc + bfc
    f = f * jax.nn.sigmoid(1.702 * f)
    m = f @ wproj + bproj
    out = x1 + m
    return jnp.transpose(out, (1, 0, 2))


def init_params(key, d_model):
    ks = jax.random.split(key, 8)
    D = d_model
    std = 0.02
    ln1_g = jnp.ones((1, D), jnp.float32)
    ln1_b = jnp.zeros((1, D), jnp.float32)
    # in_proj (3D, D) split into q/k/v, stored pre-transposed for x @ W
    wq = std * jax.random.normal(ks[0], (D, D), jnp.float32)
    wk = std * jax.random.normal(ks[1], (D, D), jnp.float32)
    wv = std * jax.random.normal(ks[2], (D, D), jnp.float32)
    bq = std * jax.random.normal(ks[3], (1, D), jnp.float32)
    bk = jnp.zeros((1, D), jnp.float32)
    bv = std * jax.random.normal(ks[4], (1, D), jnp.float32)
    wo = std * jax.random.normal(ks[5], (D, D), jnp.float32)
    bo = jnp.zeros((1, D), jnp.float32)
    ln2_g = jnp.ones((1, D), jnp.float32)
    ln2_b = jnp.zeros((1, D), jnp.float32)
    wfc = std * jax.random.normal(ks[6], (D, 4 * D), jnp.float32)
    bfc = jnp.zeros((1, 4 * D), jnp.float32)
    wproj = std * jax.random.normal(ks[7], (4 * D, D), jnp.float32)
    bproj = jnp.zeros((1, D), jnp.float32)
    return (ln1_g, ln1_b, wq, wk, wv, bq, bk, bv, wo, bo,
            ln2_g, ln2_b, wfc, bfc, wproj, bproj)


if __name__ == "__main__":
    S, B, D, H = 8, 2, 32, 4
    key = jax.random.PRNGKey(0)
    kx, kp = jax.random.split(key)
    x = jax.random.normal(kx, (S, B, D), jnp.float32)      # (seq, batch, d_model)
    params = init_params(kp, D)

    out = residual_attention_block(x, params, H)
    out = jax.block_until_ready(out)

    ref = ref_block(x, params, H)
    assert out.shape == (S, B, D)
    # bf16 matmul operands (f32 accumulation) vs the pure-f32 reference.
    assert jnp.allclose(out, ref, atol=2e-2, rtol=2e-2), "mismatch vs reference"
    print("KERNEL_OK")
</pallas_src>

<mosaic_0001>
module attributes {stable_mosaic.version = 11 : i64} {
  func.func @_block_kernel(%arg0: i32, %arg1: memref<1x8x32xf32, #tpu.memory_space<vmem>>, %arg2: memref<1x32xf32, #tpu.memory_space<vmem>>, %arg3: memref<1x32xf32, #tpu.memory_space<vmem>>, %arg4: memref<32x32xbf16, #tpu.memory_space<vmem>>, %arg5: memref<32x32xbf16, #tpu.memory_space<vmem>>, %arg6: memref<32x32xbf16, #tpu.memory_space<vmem>>, %arg7: memref<1x32xf32, #tpu.memory_space<vmem>>, %arg8: memref<1x32xf32, #tpu.memory_space<vmem>>, %arg9: memref<1x32xf32, #tpu.memory_space<vmem>>, %arg10: memref<32x32xbf16, #tpu.memory_space<vmem>>, %arg11: memref<1x32xf32, #tpu.memory_space<vmem>>, %arg12: memref<1x32xf32, #tpu.memory_space<vmem>>, %arg13: memref<1x32xf32, #tpu.memory_space<vmem>>, %arg14: memref<32x128xbf16, #tpu.memory_space<vmem>>, %arg15: memref<1x128xf32, #tpu.memory_space<vmem>>, %arg16: memref<128x32xbf16, #tpu.memory_space<vmem>>, %arg17: memref<1x32xf32, #tpu.memory_space<vmem>>, %arg18: memref<1x8x32xf32, #tpu.memory_space<vmem>>) attributes {dimension_semantics = [#tpu.dimension_semantics<parallel>], iteration_bounds = array<i64: 2>, scalar_prefetch = 0 : i64, scratch_operands = 0 : i64, tpu.core_type = #tpu.core_type<tc>, window_params = [{transform_indices = @transform_0, window_bounds = array<i64: 1, 8, 32>}, {pipeline_mode = #tpu.pipeline_mode<synchronous>, transform_indices = @transform_1, window_bounds = array<i64: 1, 32>}, {pipeline_mode = #tpu.pipeline_mode<synchronous>, transform_indices = @transform_2, window_bounds = array<i64: 1, 32>}, {pipeline_mode = #tpu.pipeline_mode<synchronous>, transform_indices = @transform_3, window_bounds = array<i64: 32, 32>}, {pipeline_mode = #tpu.pipeline_mode<synchronous>, transform_indices = @transform_4, window_bounds = array<i64: 32, 32>}, {pipeline_mode = #tpu.pipeline_mode<synchronous>, transform_indices = @transform_5, window_bounds = array<i64: 32, 32>}, {pipeline_mode = #tpu.pipeline_mode<synchronous>, transform_indices = @transform_6, window_bounds = array<i64: 1, 32>}, {pipeline_mode = #tpu.pipeline_mode<synchronous>, transform_indices = @transform_7, window_bounds = array<i64: 1, 32>}, {pipeline_mode = #tpu.pipeline_mode<synchronous>, transform_indices = @transform_8, window_bounds = array<i64: 1, 32>}, {pipeline_mode = #tpu.pipeline_mode<synchronous>, transform_indices = @transform_9, window_bounds = array<i64: 32, 32>}, {pipeline_mode = #tpu.pipeline_mode<synchronous>, transform_indices = @transform_10, window_bounds = array<i64: 1, 32>}, {pipeline_mode = #tpu.pipeline_mode<synchronous>, transform_indices = @transform_11, window_bounds = array<i64: 1, 32>}, {pipeline_mode = #tpu.pipeline_mode<synchronous>, transform_indices = @transform_12, window_bounds = array<i64: 1, 32>}, {pipeline_mode = #tpu.pipeline_mode<synchronous>, transform_indices = @transform_13, window_bounds = array<i64: 32, 128>}, {pipeline_mode = #tpu.pipeline_mode<synchronous>, transform_indices = @transform_14, window_bounds = array<i64: 1, 128>}, {pipeline_mode = #tpu.pipeline_mode<synchronous>, transform_indices = @transform_15, window_bounds = array<i64: 128, 32>}, {pipeline_mode = #tpu.pipeline_mode<synchronous>, transform_indices = @transform_16, window_bounds = array<i64: 1, 32>}, {transform_indices = @transform_17, window_bounds = array<i64: 1, 8, 32>}]} {
    %c0 = arith.constant 0 : index
    %c0_0 = arith.constant 0 : index
    %c0_1 = arith.constant 0 : index
    %0 = vector.load %arg1[%c0, %c0_0, %c0_1] : memref<1x8x32xf32, #tpu.memory_space<vmem>>, vector<1x8x32xf32>
    %1 = vector.shape_cast %0 : vector<1x8x32xf32> to vector<8x32xf32>
    %c0_2 = arith.constant 0 : index
    %c0_3 = arith.constant 0 : index
    %2 = vector.load %arg2[%c0_2, %c0_3] : memref<1x32xf32, #tpu.memory_space<vmem>>, vector<1x32xf32>
    %c0_4 = arith.constant 0 : index
    %c0_5 = arith.constant 0 : index
    %3 = vector.load %arg3[%c0_4, %c0_5] : memref<1x32xf32, #tpu.memory_space<vmem>>, vector<1x32xf32>
    %cst = arith.constant dense<0.000000e+00> : vector<8xf32>
    %4 = vector.multi_reduction <add>, %1, %cst [1] : vector<8x32xf32> to vector<8xf32>
    %5 = vector.shape_cast %4 : vector<8xf32> to vector<8x1xf32>
    %cst_6 = arith.constant 3.200000e+01 : f32
    %6 = vector.broadcast %cst_6 : f32 to vector<8x1xf32>
    %7 = arith.divf %5, %6 : vector<8x1xf32>
    %8 = vector.broadcast %7 : vector<8x1xf32> to vector<8x32xf32>
    %9 = arith.subf %1, %8 : vector<8x32xf32>
    %10 = arith.mulf %9, %9 : vector<8x32xf32>
    %cst_7 = arith.constant dense<0.000000e+00> : vector<8xf32>
    %11 = vector.multi_reduction <add>, %10, %cst_7 [1] : vector<8x32xf32> to vector<8xf32>
    %12 = vector.shape_cast %11 : vector<8xf32> to vector<8x1xf32>
    %cst_8 = arith.constant 3.200000e+01 : f32
    %13 = vector.broadcast %cst_8 : f32 to vector<8x1xf32>
    %14 = arith.divf %12, %13 : vector<8x1xf32>
    %cst_9 = arith.constant 9.99999974E-6 : f32
    %15 = vector.broadcast %cst_9 : f32 to vector<8x1xf32>
    %16 = arith.addf %14, %15 : vector<8x1xf32>
    %17 = math.rsqrt %16 : vector<8x1xf32>
    %18 = vector.broadcast %17 : vector<8x1xf32> to vector<8x32xf32>
    %19 = arith.mulf %9, %18 : vector<8x32xf32>
    %20 = vector.broadcast %2 : vector<1x32xf32> to vector<8x32xf32>
    %21 = arith.mulf %19, %20 : vector<8x32xf32>
    %22 = vector.broadcast %3 : vector<1x32xf32> to vector<8x32xf32>
    %23 = arith.addf %21, %22 : vector<8x32xf32>
    %24 = arith.truncf %23 : vector<8x32xf32> to vector<8x32xbf16>
    %c0_10 = arith.constant 0 : index
    %c0_11 = arith.constant 0 : index
    %25 = vector.load %arg4[%c0_10, %c0_11] : memref<32x32xbf16, #tpu.memory_space<vmem>>, vector<32x32xbf16>
    %cst_12 = arith.constant dense<0.000000e+00> : vector<8x32xf32>
    %26 = tpu.matmul %24, %25, %cst_12 {dimension_numbers = #tpu.dot_dimension_numbers<[1], [0], [0], [1], [0, 0, 1, 1], [], []>} : vector<8x32xbf16>, vector<32x32xbf16>, vector<8x32xf32> -> vector<8x32xf32>
    %c0_13 = arith.constant 0 : index
    %c0_14 = arith.constant 0 : index
    %27 = vector.load %arg7[%c0_13, %c0_14] : memref<1x32xf32, #tpu.memory_space<vmem>>, vector<1x32xf32>
    %28 = vector.broadcast %27 : vector<1x32xf32> to vector<8x32xf32>
    %29 = arith.addf %26, %28 : vector<8x32xf32>
    %c0_15 = arith.constant 0 : index
    %c0_16 = arith.constant 0 : index
    %30 = vector.load %arg5[%c0_15, %c0_16] : memref<32x32xbf16, #tpu.memory_space<vmem>>, vector<32x32xbf16>
    %cst_17 = arith.constant dense<0.000000e+00> : vector<8x32xf32>
    %31 = tpu.matmul %24, %30, %cst_17 {dimension_numbers = #tpu.dot_dimension_numbers<[1], [0], [0], [1], [0, 0, 1, 1], [], []>} : vector<8x32xbf16>, vector<32x32xbf16>, vector<8x32xf32> -> vector<8x32xf32>
    %c0_18 = arith.constant 0 : index
    %c0_19 = arith.constant 0 : index
    %32 = vector.load %arg8[%c0_18, %c0_19] : memref<1x32xf32, #tpu.memory_space<vmem>>, vector<1x32xf32>
    %33 = vector.broadcast %32 : vector<1x32xf32> to vector<8x32xf32>
    %34 = arith.addf %31, %33 : vector<8x32xf32>
    %c0_20 = arith.constant 0 : index
    %c0_21 = arith.constant 0 : index
    %35 = vector.load %arg6[%c0_20, %c0_21] : memref<32x32xbf16, #tpu.memory_space<vmem>>, vector<32x32xbf16>
    %cst_22 = arith.constant dense<0.000000e+00> : vector<8x32xf32>
    %36 = tpu.matmul %24, %35, %cst_22 {dimension_numbers = #tpu.dot_dimension_numbers<[1], [0], [0], [1], [0, 0, 1, 1], [], []>} : vector<8x32xbf16>, vector<32x32xbf16>, vector<8x32xf32> -> vector<8x32xf32>
    %c0_23 = arith.constant 0 : index
    %c0_24 = arith.constant 0 : index
    %37 = vector.load %arg9[%c0_23, %c0_24] : memref<1x32xf32, #tpu.memory_space<vmem>>, vector<1x32xf32>
    %38 = vector.broadcast %37 : vector<1x32xf32> to vector<8x32xf32>
    %39 = arith.addf %36, %38 : vector<8x32xf32>
    %cst_25 = arith.constant 0.353553385 : f32
    %40 = vector.broadcast %cst_25 : f32 to vector<8x32xf32>
    %41 = arith.mulf %29, %40 : vector<8x32xf32>
    %42 = arith.truncf %41 : vector<8x32xf32> to vector<8x32xbf16>
    %43 = arith.truncf %34 : vector<8x32xf32> to vector<8x32xbf16>
    %44 = arith.truncf %39 : vector<8x32xf32> to vector<8x32xbf16>
    %45 = vector.extract_strided_slice %42 {offsets = [0, 0], sizes = [8, 8], strides = [1, 1]} : vector<8x32xbf16> to vector<8x8xbf16>
    %46 = vector.extract_strided_slice %43 {offsets = [0, 0], sizes = [8, 8], strides = [1, 1]} : vector<8x32xbf16> to vector<8x8xbf16>
    %47 = vector.extract_strided_slice %44 {offsets = [0, 0], sizes = [8, 8], strides = [1, 1]} : vector<8x32xbf16> to vector<8x8xbf16>
    %cst_26 = arith.constant dense<0.000000e+00> : vector<8x8xf32>
    %48 = tpu.matmul %45, %46, %cst_26 {dimension_numbers = #tpu.dot_dimension_numbers<[1], [1], [0], [0], [0, 0, 1, 0], [], []>} : vector<8x8xbf16>, vector<8x8xbf16>, vector<8x8xf32> -> vector<8x8xf32>
    %cst_27 = arith.constant dense<0xFF800000> : vector<8xf32>
    %49 = vector.multi_reduction <maximumf>, %48, %cst_27 [1] : vector<8x8xf32> to vector<8xf32>
    %50 = vector.shape_cast %49 : vector<8xf32> to vector<8x1xf32>
    %51 = vector.broadcast %50 : vector<8x1xf32> to vector<8x8xf32>
    %52 = arith.subf %48, %51 : vector<8x8xf32>
    %53 = math.exp %52 : vector<8x8xf32>
    %cst_28 = arith.constant dense<0.000000e+00> : vector<8xf32>
    %54 = vector.multi_reduction <add>, %53, %cst_28 [1] : vector<8x8xf32> to vector<8xf32>
    %55 = vector.shape_cast %54 : vector<8xf32> to vector<8x1xf32>
    %56 = tpu.reciprocal %55 {approx = true} : vector<8x1xf32> -> vector<8x1xf32>
    %57 = vector.broadcast %56 : vector<8x1xf32> to vector<8x8xf32>
    %58 = arith.mulf %53, %57 : vector<8x8xf32>
    %59 = arith.truncf %58 : vector<8x8xf32> to vector<8x8xbf16>
    %cst_29 = arith.constant dense<0.000000e+00> : vector<8x8xf32>
    %60 = tpu.matmul %59, %47, %cst_29 {dimension_numbers = #tpu.dot_dimension_numbers<[1], [0], [0], [1], [0, 0, 1, 1], [], []>} : vector<8x8xbf16>, vector<8x8xbf16>, vector<8x8xf32> -> vector<8x8xf32>
    %61 = vector.extract_strided_slice %42 {offsets = [0, 8], sizes = [8, 8], strides = [1, 1]} : vector<8x32xbf16> to vector<8x8xbf16>
    %62 = vector.extract_strided_slice %43 {offsets = [0, 8], sizes = [8, 8], strides = [1, 1]} : vector<8x32xbf16> to vector<8x8xbf16>
    %63 = vector.extract_strided_slice %44 {offsets = [0, 8], sizes = [8, 8], strides = [1, 1]} : vector<8x32xbf16> to vector<8x8xbf16>
    %cst_30 = arith.constant dense<0.000000e+00> : vector<8x8xf32>
    %64 = tpu.matmul %61, %62, %cst_30 {dimension_numbers = #tpu.dot_dimension_numbers<[1], [1], [0], [0], [0, 0, 1, 0], [], []>} : vector<8x8xbf16>, vector<8x8xbf16>, vector<8x8xf32> -> vector<8x8xf32>
    %cst_31 = arith.constant dense<0xFF800000> : vector<8xf32>
    %65 = vector.multi_reduction <maximumf>, %64, %cst_31 [1] : vector<8x8xf32> to vector<8xf32>
    %66 = vector.shape_cast %65 : vector<8xf32> to vector<8x1xf32>
    %67 = vector.broadcast %66 : vector<8x1xf32> to vector<8x8xf32>
    %68 = arith.subf %64, %67 : vector<8x8xf32>
    %69 = math.exp %68 : vector<8x8xf32>
    %cst_32 = arith.constant dense<0.000000e+00> : vector<8xf32>
    %70 = vector.multi_reduction <add>, %69, %cst_32 [1] : vector<8x8xf32> to vector<8xf32>
    %71 = vector.shape_cast %70 : vector<8xf32> to vector<8x1xf32>
    %72 = tpu.reciprocal %71 {approx = true} : vector<8x1xf32> -> vector<8x1xf32>
    %73 = vector.broadcast %72 : vector<8x1xf32> to vector<8x8xf32>
    %74 = arith.mulf %69, %73 : vector<8x8xf32>
    %75 = arith.truncf %74 : vector<8x8xf32> to vector<8x8xbf16>
    %cst_33 = arith.constant dense<0.000000e+00> : vector<8x8xf32>
    %76 = tpu.matmul %75, %63, %cst_33 {dimension_numbers = #tpu.dot_dimension_numbers<[1], [0], [0], [1], [0, 0, 1, 1], [], []>} : vector<8x8xbf16>, vector<8x8xbf16>, vector<8x8xf32> -> vector<8x8xf32>
    %77 = vector.extract_strided_slice %42 {offsets = [0, 16], sizes = [8, 8], strides = [1, 1]} : vector<8x32xbf16> to vector<8x8xbf16>
    %78 = vector.extract_strided_slice %43 {offsets = [0, 16], sizes = [8, 8], strides = [1, 1]} : vector<8x32xbf16> to vector<8x8xbf16>
    %79 = vector.extract_strided_slice %44 {offsets = [0, 16], sizes = [8, 8], strides = [1, 1]} : vector<8x32xbf16> to vector<8x8xbf16>
    %cst_34 = arith.constant dense<0.000000e+00> : vector<8x8xf32>
    %80 = tpu.matmul %77, %78, %cst_34 {dimension_numbers = #tpu.dot_dimension_numbers<[1], [1], [0], [0], [0, 0, 1, 0], [], []>} : vector<8x8xbf16>, vector<8x8xbf16>, vector<8x8xf32> -> vector<8x8xf32>
    %cst_35 = arith.constant dense<0xFF800000> : vector<8xf32>
    %81 = vector.multi_reduction <maximumf>, %80, %cst_35 [1] : vector<8x8xf32> to vector<8xf32>
    %82 = vector.shape_cast %81 : vector<8xf32> to vector<8x1xf32>
    %83 = vector.broadcast %82 : vector<8x1xf32> to vector<8x8xf32>
    %84 = arith.subf %80, %83 : vector<8x8xf32>
    %85 = math.exp %84 : vector<8x8xf32>
    %cst_36 = arith.constant dense<0.000000e+00> : vector<8xf32>
    %86 = vector.multi_reduction <add>, %85, %cst_36 [1] : vector<8x8xf32> to vector<8xf32>
    %87 = vector.shape_cast %86 : vector<8xf32> to vector<8x1xf32>
    %88 = tpu.reciprocal %87 {approx = true} : vector<8x1xf32> -> vector<8x1xf32>
    %89 = vector.broadcast %88 : vector<8x1xf32> to vector<8x8xf32>
    %90 = arith.mulf %85, %89 : vector<8x8xf32>
    %91 = arith.truncf %90 : vector<8x8xf32> to vector<8x8xbf16>
    %cst_37 = arith.constant dense<0.000000e+00> : vector<8x8xf32>
    %92 = tpu.matmul %91, %79, %cst_37 {dimension_numbers = #tpu.dot_dimension_numbers<[1], [0], [0], [1], [0, 0, 1, 1], [], []>} : vector<8x8xbf16>, vector<8x8xbf16>, vector<8x8xf32> -> vector<8x8xf32>
    %93 = vector.extract_strided_slice %42 {offsets = [0, 24], sizes = [8, 8], strides = [1, 1]} : vector<8x32xbf16> to vector<8x8xbf16>
    %94 = vector.extract_strided_slice %43 {offsets = [0, 24], sizes = [8, 8], strides = [1, 1]} : vector<8x32xbf16> to vector<8x8xbf16>
    %95 = vector.extract_strided_slice %44 {offsets = [0, 24], sizes = [8, 8], strides = [1, 1]} : vector<8x32xbf16> to vector<8x8xbf16>
    %cst_38 = arith.constant dense<0.000000e+00> : vector<8x8xf32>
    %96 = tpu.matmul %93, %94, %cst_38 {dimension_numbers = #tpu.dot_dimension_numbers<[1], [1], [0], [0], [0, 0, 1, 0], [], []>} : vector<8x8xbf16>, vector<8x8xbf16>, vector<8x8xf32> -> vector<8x8xf32>
    %cst_39 = arith.constant dense<0xFF800000> : vector<8xf32>
    %97 = vector.multi_reduction <maximumf>, %96, %cst_39 [1] : vector<8x8xf32> to vector<8xf32>
    %98 = vector.shape_cast %97 : vector<8xf32> to vector<8x1xf32>
    %99 = vector.broadcast %98 : vector<8x1xf32> to vector<8x8xf32>
    %100 = arith.subf %96, %99 : vector<8x8xf32>
    %101 = math.exp %100 : vector<8x8xf32>
    %cst_40 = arith.constant dense<0.000000e+00> : vector<8xf32>
    %102 = vector.multi_reduction <add>, %101, %cst_40 [1] : vector<8x8xf32> to vector<8xf32>
    %103 = vector.shape_cast %102 : vector<8xf32> to vector<8x1xf32>
    %104 = tpu.reciprocal %103 {approx = true} : vector<8x1xf32> -> vector<8x1xf32>
    %105 = vector.broadcast %104 : vector<8x1xf32> to vector<8x8xf32>
    %106 = arith.mulf %101, %105 : vector<8x8xf32>
    %107 = arith.truncf %106 : vector<8x8xf32> to vector<8x8xbf16>
    %cst_41 = arith.constant dense<0.000000e+00> : vector<8x8xf32>
    %108 = tpu.matmul %107, %95, %cst_41 {dimension_numbers = #tpu.dot_dimension_numbers<[1], [0], [0], [1], [0, 0, 1, 1], [], []>} : vector<8x8xbf16>, vector<8x8xbf16>, vector<8x8xf32> -> vector<8x8xf32>
    %109 = tpu.concatenate %60, %76, %92, %108 in 1 : vector<8x8xf32>, vector<8x8xf32>, vector<8x8xf32>, vector<8x8xf32> -> vector<8x32xf32>
    %110 = arith.truncf %109 : vector<8x32xf32> to vector<8x32xbf16>
    %c0_42 = arith.constant 0 : index
    %c0_43 = arith.constant 0 : index
    %111 = vector.load %arg10[%c0_42, %c0_43] : memref<32x32xbf16, #tpu.memory_space<vmem>>, vector<32x32xbf16>
    %cst_44 = arith.constant dense<0.000000e+00> : vector<8x32xf32>
    %112 = tpu.matmul %110, %111, %cst_44 {dimension_numbers = #tpu.dot_dimension_numbers<[1], [0], [0], [1], [0, 0, 1, 1], [], []>} : vector<8x32xbf16>, vector<32x32xbf16>, vector<8x32xf32> -> vector<8x32xf32>
    %c0_45 = arith.constant 0 : index
    %c0_46 = arith.constant 0 : index
    %113 = vector.load %arg11[%c0_45, %c0_46] : memref<1x32xf32, #tpu.memory_space<vmem>>, vector<1x32xf32>
    %114 = vector.broadcast %113 : vector<1x32xf32> to vector<8x32xf32>
    %115 = arith.addf %112, %114 : vector<8x32xf32>
    %116 = arith.addf %1, %115 : vector<8x32xf32>
    %c0_47 = arith.constant 0 : index
    %c0_48 = arith.constant 0 : index
    %117 = vector.load %arg12[%c0_47, %c0_48] : memref<1x32xf32, #tpu.memory_space<vmem>>, vector<1x32xf32>
    %c0_49 = arith.constant 0 : index
    %c0_50 = arith.constant 0 : index
    %118 = vector.load %arg13[%c0_49, %c0_50] : memref<1x32xf32, #tpu.memory_space<vmem>>, vector<1x32xf32>
    %cst_51 = arith.constant dense<0.000000e+00> : vector<8xf32>
    %119 = vector.multi_reduction <add>, %116, %cst_51 [1] : vector<8x32xf32> to vector<8xf32>
    %120 = vector.shape_cast %119 : vector<8xf32> to vector<8x1xf32>
    %cst_52 = arith.constant 3.200000e+01 : f32
    %121 = vector.broadcast %cst_52 : f32 to vector<8x1xf32>
    %122 = arith.divf %120, %121 : vector<8x1xf32>
    %123 = vector.broadcast %122 : vector<8x1xf32> to vector<8x32xf32>
    %124 = arith.subf %116, %123 : vector<8x32xf32>
    %125 = arith.mulf %124, %124 : vector<8x32xf32>
    %cst_53 = arith.constant dense<0.000000e+00> : vector<8xf32>
    %126 = vector.multi_reduction <add>, %125, %cst_53 [1] : vector<8x32xf32> to vector<8xf32>
    %127 = vector.shape_cast %126 : vector<8xf32> to vector<8x1xf32>
    %cst_54 = arith.constant 3.200000e+01 : f32
    %128 = vector.broadcast %cst_54 : f32 to vector<8x1xf32>
    %129 = arith.divf %127, %128 : vector<8x1xf32>
    %cst_55 = arith.constant 9.99999974E-6 : f32
    %130 = vector.broadcast %cst_55 : f32 to vector<8x1xf32>
    %131 = arith.addf %129, %130 : vector<8x1xf32>
    %132 = math.rsqrt %131 : vector<8x1xf32>
    %133 = vector.broadcast %132 : vector<8x1xf32> to vector<8x32xf32>
    %134 = arith.mulf %124, %133 : vector<8x32xf32>
    %135 = vector.broadcast %117 : vector<1x32xf32> to vector<8x32xf32>
    %136 = arith.mulf %134, %135 : vector<8x32xf32>
    %137 = vector.broadcast %118 : vector<1x32xf32> to vector<8x32xf32>
    %138 = arith.addf %136, %137 : vector<8x32xf32>
    %139 = arith.truncf %138 : vector<8x32xf32> to vector<8x32xbf16>
    %c0_56 = arith.constant 0 : index
    %c0_57 = arith.constant 0 : index
    %140 = vector.load %arg14[%c0_56, %c0_57] : memref<32x128xbf16, #tpu.memory_space<vmem>>, vector<32x128xbf16>
    %cst_58 = arith.constant dense<0.000000e+00> : vector<8x128xf32>
    %141 = tpu.matmul %139, %140, %cst_58 {dimension_numbers = #tpu.dot_dimension_numbers<[1], [0], [0], [1], [0, 0, 1, 1], [], []>} : vector<8x32xbf16>, vector<32x128xbf16>, vector<8x128xf32> -> vector<8x128xf32>
    %c0_59 = arith.constant 0 : index
    %c0_60 = arith.constant 0 : index
    %142 = vector.load %arg15[%c0_59, %c0_60] : memref<1x128xf32, #tpu.memory_space<vmem>>, vector<1x128xf32>
    %143 = vector.broadcast %142 : vector<1x128xf32> to vector<8x128xf32>
    %144 = arith.addf %141, %143 : vector<8x128xf32>
    %cst_61 = arith.constant 1.702000e+00 : f32
    %145 = vector.broadcast %cst_61 : f32 to vector<8x128xf32>
    %146 = arith.mulf %145, %144 : vector<8x128xf32>
    %147 = arith.negf %146 : vector<8x128xf32>
    %148 = math.exp %147 : vector<8x128xf32>
    %cst_62 = arith.constant 1.000000e+00 : f32
    %149 = vector.broadcast %cst_62 : f32 to vector<8x128xf32>
    %150 = arith.addf %149, %148 : vector<8x128xf32>
    %151 = arith.divf %149, %150 : vector<8x128xf32>
    %152 = arith.mulf %144, %151 : vector<8x128xf32>
    %153 = arith.truncf %152 : vector<8x128xf32> to vector<8x128xbf16>
    %c0_63 = arith.constant 0 : index
    %c0_64 = arith.constant 0 : index
    %154 = vector.load %arg16[%c0_63, %c0_64] : memref<128x32xbf16, #tpu.memory_space<vmem>>, vector<128x32xbf16>
    %cst_65 = arith.constant dense<0.000000e+00> : vector<8x32xf32>
    %155 = tpu.matmul %153, %154, %cst_65 {dimension_numbers = #tpu.dot_dimension_numbers<[1], [0], [0], [1], [0, 0, 1, 1], [], []>} : vector<8x128xbf16>, vector<128x32xbf16>, vector<8x32xf32> -> vector<8x32xf32>
    %c0_66 = arith.constant 0 : index
    %c0_67 = arith.constant 0 : index
    %156 = vector.load %arg17[%c0_66, %c0_67] : memref<1x32xf32, #tpu.memory_space<vmem>>, vector<1x32xf32>
    %157 = vector.broadcast %156 : vector<1x32xf32> to vector<8x32xf32>
    %158 = arith.addf %155, %157 : vector<8x32xf32>
    %159 = arith.addf %116, %158 : vector<8x32xf32>
    %c0_68 = arith.constant 0 : index
    %c0_69 = arith.constant 0 : index
    %c0_70 = arith.constant 0 : index
    %160 = vector.load %arg18[%c0_68, %c0_69, %c0_70] : memref<1x8x32xf32, #tpu.memory_space<vmem>>, vector<1x8x32xf32>
    %161 = vector.shape_cast %160 : vector<1x8x32xf32> to vector<8x32xf32>
    %162 = vector.shape_cast %159 : vector<8x32xf32> to vector<1x8x32xf32>
    tpu.vector_store %arg18[%c0_68, %c0_69, %c0_70], %162 {strides = array<i32>} : memref<1x8x32xf32, #tpu.memory_space<vmem>>, vector<1x8x32xf32>,
    return
  }
  func.func @transform_0(%arg0: i32) -> (i32, i32, i32) {
    %c0_i32 = arith.constant 0 : i32
    %c0_i32_0 = arith.constant 0 : i32
    %c0_i32_1 = arith.constant 0 : i32
    return %arg0, %c0_i32, %c0_i32_0 : i32, i32, i32
  }
  func.func @transform_1(%arg0: i32) -> (i32, i32) {
    %c0_i32 = arith.constant 0 : i32
    %c0_i32_0 = arith.constant 0 : i32
    %c0_i32_1 = arith.constant 0 : i32
    return %c0_i32, %c0_i32_0 : i32, i32
  }
  func.func @transform_2(%arg0: i32) -> (i32, i32) {
    %c0_i32 = arith.constant 0 : i32
    %c0_i32_0 = arith.constant 0 : i32
    %c0_i32_1 = arith.constant 0 : i32
    return %c0_i32, %c0_i32_0 : i32, i32
  }
  func.func @transform_3(%arg0: i32) -> (i32, i32) {
    %c0_i32 = arith.constant 0 : i32
    %c0_i32_0 = arith.constant 0 : i32
    %c0_i32_1 = arith.constant 0 : i32
    return %c0_i32, %c0_i32_0 : i32, i32
  }
  func.func @transform_4(%arg0: i32) -> (i32, i32) {
    %c0_i32 = arith.constant 0 : i32
    %c0_i32_0 = arith.constant 0 : i32
    %c0_i32_1 = arith.constant 0 : i32
    return %c0_i32, %c0_i32_0 : i32, i32
  }
  func.func @transform_5(%arg0: i32) -> (i32, i32) {
    %c0_i32 = arith.constant 0 : i32
    %c0_i32_0 = arith.constant 0 : i32
    %c0_i32_1 = arith.constant 0 : i32
    return %c0_i32, %c0_i32_0 : i32, i32
  }
  func.func @transform_6(%arg0: i32) -> (i32, i32) {
    %c0_i32 = arith.constant 0 : i32
    %c0_i32_0 = arith.constant 0 : i32
    %c0_i32_1 = arith.constant 0 : i32
    return %c0_i32, %c0_i32_0 : i32, i32
  }
  func.func @transform_7(%arg0: i32) -> (i32, i32) {
    %c0_i32 = arith.constant 0 : i32
    %c0_i32_0 = arith.constant 0 : i32
    %c0_i32_1 = arith.constant 0 : i32
    return %c0_i32, %c0_i32_0 : i32, i32
  }
  func.func @transform_8(%arg0: i32) -> (i32, i32) {
    %c0_i32 = arith.constant 0 : i32
    %c0_i32_0 = arith.constant 0 : i32
    %c0_i32_1 = arith.constant 0 : i32
    return %c0_i32, %c0_i32_0 : i32, i32
  }
  func.func @transform_9(%arg0: i32) -> (i32, i32) {
    %c0_i32 = arith.constant 0 : i32
    %c0_i32_0 = arith.constant 0 : i32
    %c0_i32_1 = arith.constant 0 : i32
    return %c0_i32, %c0_i32_0 : i32, i32
  }
  func.func @transform_10(%arg0: i32) -> (i32, i32) {
    %c0_i32 = arith.constant 0 : i32
    %c0_i32_0 = arith.constant 0 : i32
    %c0_i32_1 = arith.constant 0 : i32
    return %c0_i32, %c0_i32_0 : i32, i32
  }
  func.func @transform_11(%arg0: i32) -> (i32, i32) {
    %c0_i32 = arith.constant 0 : i32
    %c0_i32_0 = arith.constant 0 : i32
    %c0_i32_1 = arith.constant 0 : i32
    return %c0_i32, %c0_i32_0 : i32, i32
  }
  func.func @transform_12(%arg0: i32) -> (i32, i32) {
    %c0_i32 = arith.constant 0 : i32
    %c0_i32_0 = arith.constant 0 : i32
    %c0_i32_1 = arith.constant 0 : i32
    return %c0_i32, %c0_i32_0 : i32, i32
  }
  func.func @transform_13(%arg0: i32) -> (i32, i32) {
    %c0_i32 = arith.constant 0 : i32
    %c0_i32_0 = arith.constant 0 : i32
    %c0_i32_1 = arith.constant 0 : i32
    return %c0_i32, %c0_i32_0 : i32, i32
  }
  func.func @transform_14(%arg0: i32) -> (i32, i32) {
    %c0_i32 = arith.constant 0 : i32
    %c0_i32_0 = arith.constant 0 : i32
    %c0_i32_1 = arith.constant 0 : i32
    return %c0_i32, %c0_i32_0 : i32, i32
  }
  func.func @transform_15(%arg0: i32) -> (i32, i32) {
    %c0_i32 = arith.constant 0 : i32
    %c0_i32_0 = arith.constant 0 : i32
    %c0_i32_1 = arith.constant 0 : i32
    return %c0_i32, %c0_i32_0 : i32, i32
  }
  func.func @transform_16(%arg0: i32) -> (i32, i32) {
    %c0_i32 = arith.constant 0 : i32
    %c0_i32_0 = arith.constant 0 : i32
    %c0_i32_1 = arith.constant 0 : i32
    return %c0_i32, %c0_i32_0 : i32, i32
  }
  func.func @transform_17(%arg0: i32) -> (i32, i32, i32) {
    %c0_i32 = arith.constant 0 : i32
    %c0_i32_0 = arith.constant 0 : i32
    %c0_i32_1 = arith.constant 0 : i32
    return %arg0, %c0_i32, %c0_i32_0 : i32, i32, i32
  }
}

</mosaic_0001>

<llo_original>
// kernel: tpu_custom_call.1
$region0: #{tpu_custom_call.1}
  #allocation0 [shape = 'u32[]', space=smem, size = 0x4, offset = 0x4, fixed_abs, tag = 'smem constant byte address 0x4 - core index']
  #allocation1 [shape = 'u32[144,128]{1,0:T(1,128)}', space=vmem, size = 0x12000, scoped, tag = 'internal scratch']
  %s0 = inlined_call_operand.vmem [shape: f32[2,8,32], index: 0, kind: input, shape index: {}]
  %s1 = inlined_call_operand.vmem [shape: f32[1,32], index: 1, kind: input, shape index: {}]
  %s2 = inlined_call_operand.vmem [shape: f32[1,32], index: 2, kind: input, shape index: {}]
  %s3 = inlined_call_operand.vmem [shape: bf16[32,32], index: 3, kind: input, shape index: {}]
  %s4 = inlined_call_operand.vmem [shape: bf16[32,32], index: 4, kind: input, shape index: {}]
  %s5 = inlined_call_operand.vmem [shape: bf16[32,32], index: 5, kind: input, shape index: {}]
  %s6 = inlined_call_operand.hbm [shape: f32[1,32], index: 6, kind: input, shape index: {}]
  %s7 = inlined_call_operand.hbm [shape: f32[1,32], index: 7, kind: input, shape index: {}]
  %s8 = inlined_call_operand.hbm [shape: f32[1,32], index: 8, kind: input, shape index: {}]
  %s9 = inlined_call_operand.vmem [shape: bf16[32,32], index: 9, kind: input, shape index: {}]
  %s10 = inlined_call_operand.vmem [shape: f32[1,32], index: 10, kind: input, shape index: {}]
  %s11 = inlined_call_operand.vmem [shape: f32[1,32], index: 11, kind: input, shape index: {}]
  %s12 = inlined_call_operand.vmem [shape: f32[1,32], index: 12, kind: input, shape index: {}]
  %s13 = inlined_call_operand.vmem [shape: bf16[32,128], index: 13, kind: input, shape index: {}]
  %s14 = inlined_call_operand.vmem [shape: f32[1,128], index: 14, kind: input, shape index: {}]
  %s15 = inlined_call_operand.vmem [shape: bf16[128,32], index: 15, kind: input, shape index: {}]
  %s16 = inlined_call_operand.vmem [shape: f32[1,32], index: 16, kind: input, shape index: {}]
  %s17 = inlined_call_operand.hbm [shape: f32[2,8,32], index: 17, kind: output, shape index: {}]
  %s18 = sld [smem:[#allocation0]]
  $region113: #{tpu_custom_call.1} parent=0
    _
  %s20 = ssub.s32 1, %s18
  %s21 = scalar_select 0, %s20, %s18
  $region1: #{tpu_custom_call.1} parent=0
    #allocation2 [shape = 'u8[512]{0}', space=vmem, size = 0x400, scoped, tag = 'input window, operand 6, single buffered']
    #allocation3 [shape = 's32[2]{0}', space=sflag, size = 0x8, scoped, tag = 'scoped memory for tpu_custom_call.1']
    #allocation4 [shape = 's32[2]{0}', space=sflag, size = 0x8, scoped, tag = 'scoped memory for tpu_custom_call.1']
    #allocation5 [shape = 'u8[512]{0}', space=vmem, size = 0x400, scoped, tag = 'input window, operand 7, single buffered']
    #allocation6 [shape = 's32[1]{0}', space=sflag, size = 0x4, scoped, tag = 'scoped memory for tpu_custom_call.1']
    #allocation7 [shape = 'u8[512]{0}', space=vmem, size = 0x400, scoped, tag = 'input window, operand 8, single buffered']
    #allocation8 [shape = 'u8[8192]{0}', space=vmem, size = 0x2000, scoped, tag = 'output window, operand 0']
    %22 = vsyncpa [#allocation3], 0
    %23 = vsyncpa [#allocation6], 0
    %24 = vsyncpa [#allocation4], 0
    %s25 = scalar_lea.sflag [#allocation4], 1
    %26 = vsyncpa %s25, 0
    loop: start=0, step=1, limit=4
    $region2: #{tpu_custom_call.1} parent=1 // loop_pre_header
      _
    $region3: #{tpu_custom_call.1} parent=1 // loop_header
      %s28 = sphi 0, %s32
      %p29 = scmp.ge.s32.totalorder %s28, 4
      %s38 = sphi 0, %s40
      %s41 = sphi 0, %s38
      %s42 = sphi 0, %s41
      %s58 = sphi 0, %s42
      %s62 = sphi 0, %s62
      %s64 = sphi 0, %s62
      %s65 = sphi 0, %s64
      %s79 = sphi 0, %s65
      %s83 = sphi 0, %s83
      %s85 = sphi 0, %s83
      %s86 = sphi 0, %s85
      %s100 = sphi 0, %s86
      %s104 = sphi 0, %s104
      %s106 = sphi 0, %s104
      %s107 = sphi 0, %s106
      %s121 = sphi 0, %s107
      %s125 = sphi 0, %s125
      %s127 = sphi 0, %s125
      %s128 = sphi 0, %s127
      %s142 = sphi 0, %s128
      %s146 = sphi 0, %s146
      %s148 = sphi 0, %s146
      %s149 = sphi 0, %s148
      %s163 = sphi 0, %s149
      %s167 = sphi 0, %s167
      %s169 = sphi 0, %s167
      %s170 = sphi 0, %s169
      %s184 = sphi 0, %s170
      %s188 = sphi 0, %s188
      %s190 = sphi 0, %s188
      %s191 = sphi 0, %s190
      %s205 = sphi 0, %s191
      %s209 = sphi 0, %s209
      %s211 = sphi 0, %s209
      %s212 = sphi 0, %s211
      %s226 = sphi 0, %s212
      %s230 = sphi 0, %s230
      %s232 = sphi 0, %s230
      %s233 = sphi 0, %s232
      %s247 = sphi 0, %s233
      %s251 = sphi 0, %s251
      %s253 = sphi 0, %s251
      %s254 = sphi 0, %s253
      %s268 = sphi 0, %s254
      %s272 = sphi 0, %s272
      %s274 = sphi 0, %s272
      %s275 = sphi 0, %s274
      %s289 = sphi 0, %s275
      %s293 = sphi 0, %s293
      %s295 = sphi 0, %s293
      %s296 = sphi 0, %s295
      %s310 = sphi 0, %s296
      %s314 = sphi 0, %s314
      %s316 = sphi 0, %s314
      %s317 = sphi 0, %s316
      %s331 = sphi 0, %s317
      %s335 = sphi 0, %s335
      %s337 = sphi 0, %s335
      %s338 = sphi 0, %s337
      %s352 = sphi 0, %s338
      %s356 = sphi 0, %s356
      %s358 = sphi 0, %s356
      %s359 = sphi 0, %s358
      %s373 = sphi 0, %s359
      %s377 = sphi 0, %s377
      %s379 = sphi 0, %s377
      %s380 = sphi 0, %s379
      %s394 = sphi 0, %s380
      %s400 = sphi 0, %s402
      %s403 = sphi 0, %s400
      %s404 = sphi 0, %s403
      %s420 = sphi 0, %s404
    $region4: #{tpu_custom_call.1} parent=1 // loop_header_branch
      %31 = sbr.rel (%p29) target = $region8
    $region5: #{tpu_custom_call.1} parent=1 // loop_body
      %s33 = ssub.s32 %s28, 1
      %s34 = ssub.s32 %s28, 2
      %s35 = sadd.s32 %s28, 1
      %s36 = ssub.s32 %s28, %s35
      %p37 = scmp.eq.s32.totalorder %s36, 0
      %s39 = sadd.s32 %s38, 1
      %s40 = scalar_select %p37, %s38, %s39
      %p43 = pneg %p37
      %p44 = scmp.eq.s32.totalorder %s28, 1
      %p45 = por %p43, %p44
      %p46 = scmp.ne.s32.totalorder %s38, %s41
      %p47 = scmp.eq.s32.totalorder %s28, 0
      %p48 = por %p46, %p47
      %p49 = scmp.ne.s32.totalorder %s38, %s41
      %p50 = scmp.eq.s32.totalorder %s33, 1
      %p51 = por %p49, %p50
      %p52 = scmp.ne.s32.totalorder %s41, %s42
      %p53 = scmp.eq.s32.totalorder %s33, 0
      %p54 = por %p52, %p53
      %p55 = scmp.ne.s32.totalorder %s41, %s42
      %p56 = scmp.eq.s32.totalorder %s34, 1
      %p57 = por %p55, %p56
      %p59 = scmp.ne.s32.totalorder %s42, %s58
      %p60 = scmp.eq.s32.totalorder %s34, 0
      %p61 = por %p59, %p60
      %s63 = sadd.s32 %s62, 1
      %p66 = scmp.eq.s32.totalorder %s28, 1
      %p67 = scmp.ne.s32.totalorder %s62, %s64
      %p68 = scmp.eq.s32.totalorder %s28, 0
      %p69 = por %p67, %p68
      %p70 = scmp.ne.s32.totalorder %s62, %s64
      %p71 = scmp.eq.s32.totalorder %s33, 1
      %p72 = por %p70, %p71
      %p73 = scmp.ne.s32.totalorder %s64, %s65
      %p74 = scmp.eq.s32.totalorder %s33, 0
      %p75 = por %p73, %p74
      %p76 = scmp.ne.s32.totalorder %s64, %s65
      %p77 = scmp.eq.s32.totalorder %s34, 1
      %p78 = por %p76, %p77
      %p80 = scmp.ne.s32.totalorder %s65, %s79
      %p81 = scmp.eq.s32.totalorder %s34, 0
      %p82 = por %p80, %p81
      %s84 = sadd.s32 %s83, 1
      %p87 = scmp.eq.s32.totalorder %s28, 1
      %p88 = scmp.ne.s32.totalorder %s83, %s85
      %p89 = scmp.eq.s32.totalorder %s28, 0
      %p90 = por %p88, %p89
      %p91 = scmp.ne.s32.totalorder %s83, %s85
      %p92 = scmp.eq.s32.totalorder %s33, 1
      %p93 = por %p91, %p92
      %p94 = scmp.ne.s32.totalorder %s85, %s86
      %p95 = scmp.eq.s32.totalorder %s33, 0
      %p96 = por %p94, %p95
      %p97 = scmp.ne.s32.totalorder %s85, %s86
      %p98 = scmp.eq.s32.totalorder %s34, 1
      %p99 = por %p97, %p98
      %p101 = scmp.ne.s32.totalorder %s86, %s100
      %p102 = scmp.eq.s32.totalorder %s34, 0
      %p103 = por %p101, %p102
      %s105 = sadd.s32 %s104, 1
      %p108 = scmp.eq.s32.totalorder %s28, 1
      %p109 = scmp.ne.s32.totalorder %s104, %s106
      %p110 = scmp.eq.s32.totalorder %s28, 0
      %p111 = por %p109, %p110
      %p112 = scmp.ne.s32.totalorder %s104, %s106
      %p113 = scmp.eq.s32.totalorder %s33, 1
      %p114 = por %p112, %p113
      %p115 = scmp.ne.s32.totalorder %s106, %s107
      %p116 = scmp.eq.s32.totalorder %s33, 0
      %p117 = por %p115, %p116
      %p118 = scmp.ne.s32.totalorder %s106, %s107
      %p119 = scmp.eq.s32.totalorder %s34, 1
      %p120 = por %p118, %p119
      %p122 = scmp.ne.s32.totalorder %s107, %s121
      %p123 = scmp.eq.s32.totalorder %s34, 0
      %p124 = por %p122, %p123
      %s126 = sadd.s32 %s125, 1
      %p129 = scmp.eq.s32.totalorder %s28, 1
      %p130 = scmp.ne.s32.totalorder %s125, %s127
      %p131 = scmp.eq.s32.totalorder %s28, 0
      %p132 = por %p130, %p131
      %p133 = scmp.ne.s32.totalorder %s125, %s127
      %p134 = scmp.eq.s32.totalorder %s33, 1
      %p135 = por %p133, %p134
      %p136 = scmp.ne.s32.totalorder %s127, %s128
      %p137 = scmp.eq.s32.totalorder %s33, 0
      %p138 = por %p136, %p137
      %p139 = scmp.ne.s32.totalorder %s127, %s128
      %p140 = scmp.eq.s32.totalorder %s34, 1
      %p141 = por %p139, %p140
      %p143 = scmp.ne.s32.totalorder %s128, %s142
      %p144 = scmp.eq.s32.totalorder %s34, 0
      %p145 = por %p143, %p144
      %s147 = sadd.s32 %s146, 1
      %p150 = scmp.eq.s32.totalorder %s28, 1
      %p151 = scmp.ne.s32.totalorder %s146, %s148
      %p152 = scmp.eq.s32.totalorder %s28, 0
      %p153 = por %p151, %p152
      %p154 = scmp.ne.s32.totalorder %s146, %s148
      %p155 = scmp.eq.s32.totalorder %s33, 1
      %p156 = por %p154, %p155
      %p157 = scmp.ne.s32.totalorder %s148, %s149
      %p158 = scmp.eq.s32.totalorder %s33, 0
      %p159 = por %p157, %p158
      %p160 = scmp.ne.s32.totalorder %s148, %s149
      %p161 = scmp.eq.s32.totalorder %s34, 1
      %p162 = por %p160, %p161
      %p164 = scmp.ne.s32.totalorder %s149, %s163
      %p165 = scmp.eq.s32.totalorder %s34, 0
      %p166 = por %p164, %p165
      %s168 = sadd.s32 %s167, 1
      %p171 = scmp.eq.s32.totalorder %s28, 1
      %p172 = scmp.ne.s32.totalorder %s167, %s169
      %p173 = scmp.eq.s32.totalorder %s28, 0
      %p174 = por %p172, %p173
      %p175 = scmp.ne.s32.totalorder %s167, %s169
      %p176 = scmp.eq.s32.totalorder %s33, 1
      %p177 = por %p175, %p176
      %p178 = scmp.ne.s32.totalorder %s169, %s170
      %p179 = scmp.eq.s32.totalorder %s33, 0
      %p180 = por %p178, %p179
      %p181 = scmp.ne.s32.totalorder %s169, %s170
      %p182 = scmp.eq.s32.totalorder %s34, 1
      %p183 = por %p181, %p182
      %p185 = scmp.ne.s32.totalorder %s170, %s184
      %p186 = scmp.eq.s32.totalorder %s34, 0
      %p187 = por %p185, %p186
      %s189 = sadd.s32 %s188, 1
      %p192 = scmp.eq.s32.totalorder %s28, 1
      %p193 = scmp.ne.s32.totalorder %s188, %s190
      %p194 = scmp.eq.s32.totalorder %s28, 0
      %p195 = por %p193, %p194
      %p196 = scmp.ne.s32.totalorder %s188, %s190
      %p197 = scmp.eq.s32.totalorder %s33, 1
      %p198 = por %p196, %p197
      %p199 = scmp.ne.s32.totalorder %s190, %s191
      %p200 = scmp.eq.s32.totalorder %s33, 0
      %p201 = por %p199, %p200
      %p202 = scmp.ne.s32.totalorder %s190, %s191
      %p203 = scmp.eq.s32.totalorder %s34, 1
      %p204 = por %p202, %p203
      %p206 = scmp.ne.s32.totalorder %s191, %s205
      %p207 = scmp.eq.s32.totalorder %s34, 0
      %p208 = por %p206, %p207
      %s210 = sadd.s32 %s209, 1
      %p213 = scmp.eq.s32.totalorder %s28, 1
      %p214 = scmp.ne.s32.totalorder %s209, %s211
      %p215 = scmp.eq.s32.totalorder %s28, 0
      %p216 = por %p214, %p215
      %p217 = scmp.ne.s32.totalorder %s209, %s211
      %p218 = scmp.eq.s32.totalorder %s33, 1
      %p219 = por %p217, %p218
      %p220 = scmp.ne.s32.totalorder %s211, %s212
      %p221 = scmp.eq.s32.totalorder %s33, 0
      %p222 = por %p220, %p221
      %p223 = scmp.ne.s32.totalorder %s211, %s212
      %p224 = scmp.eq.s32.totalorder %s34, 1
      %p225 = por %p223, %p224
      %p227 = scmp.ne.s32.totalorder %s212, %s226
      %p228 = scmp.eq.s32.totalorder %s34, 0
      %p229 = por %p227, %p228
      %s231 = sadd.s32 %s230, 1
      %p234 = scmp.eq.s32.totalorder %s28, 1
      %p235 = scmp.ne.s32.totalorder %s230, %s232
      %p236 = scmp.eq.s32.totalorder %s28, 0
      %p237 = por %p235, %p236
      %p238 = scmp.ne.s32.totalorder %s230, %s232
      %p239 = scmp.eq.s32.totalorder %s33, 1
      %p240 = por %p238, %p239
      %p241 = scmp.ne.s32.totalorder %s232, %s233
      %p242 = scmp.eq.s32.totalorder %s33, 0
      %p243 = por %p241, %p242
      %p244 = scmp.ne.s32.totalorder %s232, %s233
      %p245 = scmp.eq.s32.totalorder %s34, 1
      %p246 = por %p244, %p245
      %p248 = scmp.ne.s32.totalorder %s233, %s247
      %p249 = scmp.eq.s32.totalorder %s34, 0
      %p250 = por %p248, %p249
      %s252 = sadd.s32 %s251, 1
      %p255 = scmp.eq.s32.totalorder %s28, 1
      %p256 = scmp.ne.s32.totalorder %s251, %s253
      %p257 = scmp.eq.s32.totalorder %s28, 0
      %p258 = por %p256, %p257
      %p259 = scmp.ne.s32.totalorder %s251, %s253
      %p260 = scmp.eq.s32.totalorder %s33, 1
      %p261 = por %p259, %p260
      %p262 = scmp.ne.s32.totalorder %s253, %s254
      %p263 = scmp.eq.s32.totalorder %s33, 0
      %p264 = por %p262, %p263
      %p265 = scmp.ne.s32.totalorder %s253, %s254
      %p266 = scmp.eq.s32.totalorder %s34, 1
      %p267 = por %p265, %p266
      %p269 = scmp.ne.s32.totalorder %s254, %s268
      %p270 = scmp.eq.s32.totalorder %s34, 0
      %p271 = por %p269, %p270
      %s273 = sadd.s32 %s272, 1
      %p276 = scmp.eq.s32.totalorder %s28, 1
      %p277 = scmp.ne.s32.totalorder %s272, %s274
      %p278 = scmp.eq.s32.totalorder %s28, 0
      %p279 = por %p277, %p278
      %p280 = scmp.ne.s32.totalorder %s272, %s274
      %p281 = scmp.eq.s32.totalorder %s33, 1
      %p282 = por %p280, %p281
      %p283 = scmp.ne.s32.totalorder %s274, %s275
      %p284 = scmp.eq.s32.totalorder %s33, 0
      %p285 = por %p283, %p284
      %p286 = scmp.ne.s32.totalorder %s274, %s275
      %p287 = scmp.eq.s32.totalorder %s34, 1
      %p288 = por %p286, %p287
      %p290 = scmp.ne.s32.totalorder %s275, %s289
      %p291 = scmp.eq.s32.totalorder %s34, 0
      %p292 = por %p290, %p291
      %s294 = sadd.s32 %s293, 1
      %p297 = scmp.eq.s32.totalorder %s28, 1
      %p298 = scmp.ne.s32.totalorder %s293, %s295
      %p299 = scmp.eq.s32.totalorder %s28, 0
      %p300 = por %p298, %p299
      %p301 = scmp.ne.s32.totalorder %s293, %s295
      %p302 = scmp.eq.s32.totalorder %s33, 1
      %p303 = por %p301, %p302
      %p304 = scmp.ne.s32.totalorder %s295, %s296
      %p305 = scmp.eq.s32.totalorder %s33, 0
      %p306 = por %p304, %p305
      %p307 = scmp.ne.s32.totalorder %s295, %s296
      %p308 = scmp.eq.s32.totalorder %s34, 1
      %p309 = por %p307, %p308
      %p311 = scmp.ne.s32.totalorder %s296, %s310
      %p312 = scmp.eq.s32.totalorder %s34, 0
      %p313 = por %p311, %p312
      %s315 = sadd.s32 %s314, 1
      %p318 = scmp.eq.s32.totalorder %s28, 1
      %p319 = scmp.ne.s32.totalorder %s314, %s316
      %p320 = scmp.eq.s32.totalorder %s28, 0
      %p321 = por %p319, %p320
      %p322 = scmp.ne.s32.totalorder %s314, %s316
      %p323 = scmp.eq.s32.totalorder %s33, 1
      %p324 = por %p322, %p323
      %p325 = scmp.ne.s32.totalorder %s316, %s317
      %p326 = scmp.eq.s32.totalorder %s33, 0
      %p327 = por %p325, %p326
      %p328 = scmp.ne.s32.totalorder %s316, %s317
      %p329 = scmp.eq.s32.totalorder %s34, 1
      %p330 = por %p328, %p329
      %p332 = scmp.ne.s32.totalorder %s317, %s331
      %p333 = scmp.eq.s32.totalorder %s34, 0
      %p334 = por %p332, %p333
      %s336 = sadd.s32 %s335, 1
      %p339 = scmp.eq.s32.totalorder %s28, 1
      %p340 = scmp.ne.s32.totalorder %s335, %s337
      %p341 = scmp.eq.s32.totalorder %s28, 0
      %p342 = por %p340, %p341
      %p343 = scmp.ne.s32.totalorder %s335, %s337
      %p344 = scmp.eq.s32.totalorder %s33, 1
      %p345 = por %p343, %p344
      %p346 = scmp.ne.s32.totalorder %s337, %s338
      %p347 = scmp.eq.s32.totalorder %s33, 0
      %p348 = por %p346, %p347
      %p349 = scmp.ne.s32.totalorder %s337, %s338
      %p350 = scmp.eq.s32.totalorder %s34, 1
      %p351 = por %p349, %p350
      %p353 = scmp.ne.s32.totalorder %s338, %s352
      %p354 = scmp.eq.s32.totalorder %s34, 0
      %p355 = por %p353, %p354
      %s357 = sadd.s32 %s356, 1
      %p360 = scmp.eq.s32.totalorder %s28, 1
      %p361 = scmp.ne.s32.totalorder %s356, %s358
      %p362 = scmp.eq.s32.totalorder %s28, 0
      %p363 = por %p361, %p362
      %p364 = scmp.ne.s32.totalorder %s356, %s358
      %p365 = scmp.eq.s32.totalorder %s33, 1
      %p366 = por %p364, %p365
      %p367 = scmp.ne.s32.totalorder %s358, %s359
      %p368 = scmp.eq.s32.totalorder %s33, 0
      %p369 = por %p367, %p368
      %p370 = scmp.ne.s32.totalorder %s358, %s359
      %p371 = scmp.eq.s32.totalorder %s34, 1
      %p372 = por %p370, %p371
      %p374 = scmp.ne.s32.totalorder %s359, %s373
      %p375 = scmp.eq.s32.totalorder %s34, 0
      %p376 = por %p374, %p375
      %s378 = sadd.s32 %s377, 1
      %p381 = scmp.eq.s32.totalorder %s28, 1
      %p382 = scmp.ne.s32.totalorder %s377, %s379
      %p383 = scmp.eq.s32.totalorder %s28, 0
      %p384 = por %p382, %p383
      %p385 = scmp.ne.s32.totalorder %s377, %s379
      %p386 = scmp.eq.s32.totalorder %s33, 1
      %p387 = por %p385, %p386
      %p388 = scmp.ne.s32.totalorder %s379, %s380
      %p389 = scmp.eq.s32.totalorder %s33, 0
      %p390 = por %p388, %p389
      %p391 = scmp.ne.s32.totalorder %s379, %s380
      %p392 = scmp.eq.s32.totalorder %s34, 1
      %p393 = por %p391, %p392
      %p395 = scmp.ne.s32.totalorder %s380, %s394
      %p396 = scmp.eq.s32.totalorder %s34, 0
      %p397 = por %p395, %p396
      %s398 = ssub.s32 %s28, %s35
      %p399 = scmp.eq.s32.totalorder %s398, 0
      %s401 = sadd.s32 %s400, 1
      %s402 = scalar_select %p399, %s400, %s401
      %p405 = pneg %p399
      %p406 = scmp.eq.s32.totalorder %s28, 1
      %p407 = por %p405, %p406
      %p408 = scmp.ne.s32.totalorder %s400, %s403
      %p409 = scmp.eq.s32.totalorder %s28, 0
      %p410 = por %p408, %p409
      %p411 = scmp.ne.s32.totalorder %s400, %s403
      %p412 = scmp.eq.s32.totalorder %s33, 1
      %p413 = por %p411, %p412
      %p414 = scmp.ne.s32.totalorder %s403, %s404
      %p415 = scmp.eq.s32.totalorder %s33, 0
      %p416 = por %p414, %p415
      %p417 = scmp.ne.s32.totalorder %s403, %s404
      %p418 = scmp.eq.s32.totalorder %s34, 1
      %p419 = por %p417, %p418
      %p421 = scmp.ne.s32.totalorder %s404, %s420
      %p422 = scmp.eq.s32.totalorder %s34, 0
      %p423 = por %p421, %p422
      %p424 = scmp.le.s32.totalorder 1, %s28
      %p425 = scmp.lt.s32.totalorder %s28, 3
      %p426 = pnand %p424, %p425
      %p427 = pneg %p426
      // Predicated region
      $region9: #{tpu_custom_call.1} parent=5 // pred_check
        _
      $region10: #{tpu_custom_call.1} parent=5 // pred_check_branch
        %429 = sbr.rel (%p426) target = $region12
      $region11: #{tpu_custom_call.1} parent=5 // pred_region
        %s430 = ssub.s32 %s28, 1
        // Predicated region
        $region13: #{tpu_custom_call.1} parent=11 // pred_check
          %p431 = pneg %p75
        $region14: #{tpu_custom_call.1} parent=11 // pred_check_branch
          %433 = sbr.rel (%p431) target = $region16
        $region15: #{tpu_custom_call.1} parent=11 // pred_region
          _
        $region16: #{tpu_custom_call.1} parent=11 // pred_fallthru
          _
        // Predicated region
        $region17: #{tpu_custom_call.1} parent=11 // pred_check
          %p434 = pneg %p96
        $region18: #{tpu_custom_call.1} parent=11 // pred_check_branch
          %436 = sbr.rel (%p434) target = $region20
        $region19: #{tpu_custom_call.1} parent=11 // pred_region
          _
        $region20: #{tpu_custom_call.1} parent=11 // pred_fallthru
          _
        // Predicated region
        $region21: #{tpu_custom_call.1} parent=11 // pred_check
          %p437 = pneg %p117
        $region22: #{tpu_custom_call.1} parent=11 // pred_check_branch
          %439 = sbr.rel (%p437) target = $region24
        $region23: #{tpu_custom_call.1} parent=11 // pred_region
          _
        $region24: #{tpu_custom_call.1} parent=11 // pred_fallthru
          _
        // Predicated region
        $region25: #{tpu_custom_call.1} parent=11 // pred_check
          %p440 = pneg %p138
        $region26: #{tpu_custom_call.1} parent=11 // pred_check_branch
          %442 = sbr.rel (%p440) target = $region28
        $region27: #{tpu_custom_call.1} parent=11 // pred_region
          _
        $region28: #{tpu_custom_call.1} parent=11 // pred_fallthru
          _
        // Predicated region
        $region29: #{tpu_custom_call.1} parent=11 // pred_check
          %p443 = pneg %p159
        $region30: #{tpu_custom_call.1} parent=11 // pred_check_branch
          %445 = sbr.rel (%p443) target = $region32
        $region31: #{tpu_custom_call.1} parent=11 // pred_region
          _
        $region32: #{tpu_custom_call.1} parent=11 // pred_fallthru
          _
        // Predicated region
        $region33: #{tpu_custom_call.1} parent=11 // pred_check
          %p446 = pneg %p180
        $region34: #{tpu_custom_call.1} parent=11 // pred_check_branch
          %448 = sbr.rel (%p446) target = $region36
        $region35: #{tpu_custom_call.1} parent=11 // pred_region
          %s450 = ssub.s32 16, 16
          %451 = vsyncadd [#allocation3], %s450
          %s453 = sshll.u32 [#allocation2], 4
          %s454 = int_to_ptr.vmem [resolvable:$true] %s453
          %456 = dma.hbm_to_vmem [thread:$0]  %s6, 16, %s454, [#allocation3]
        $region36: #{tpu_custom_call.1} parent=11 // pred_fallthru
          _
        // Predicated region
        $region37: #{tpu_custom_call.1} parent=11 // pred_check
          %p457 = pneg %p201
        $region38: #{tpu_custom_call.1} parent=11 // pred_check_branch
          %459 = sbr.rel (%p457) target = $region40
        $region39: #{tpu_custom_call.1} parent=11 // pred_region
          %s461 = ssub.s32 16, 16
          %462 = vsyncadd [#allocation6], %s461
          %s464 = sshll.u32 [#allocation5], 4
          %s465 = int_to_ptr.vmem [resolvable:$true] %s464
          %467 = dma.hbm_to_vmem [thread:$0]  %s7, 16, %s465, [#allocation6]
        $region40: #{tpu_custom_call.1} parent=11 // pred_fallthru
          _
        // Predicated region
        $region41: #{tpu_custom_call.1} parent=11 // pred_check
          %p468 = pneg %p222
        $region42: #{tpu_custom_call.1} parent=11 // pred_check_branch
          %470 = sbr.rel (%p468) target = $region44
        $region43: #{tpu_custom_call.1} parent=11 // pred_region
          %s472 = ssub.s32 16, 16
          %473 = vsyncadd [#allocation6], %s472
          %s475 = sshll.u32 [#allocation7], 4
          %s476 = int_to_ptr.vmem [resolvable:$true] %s475
          %478 = dma.hbm_to_vmem [thread:$0]  %s8, 16, %s476, [#allocation6]
        $region44: #{tpu_custom_call.1} parent=11 // pred_fallthru
          _
        // Predicated region
        $region45: #{tpu_custom_call.1} parent=11 // pred_check
          %p479 = pneg %p243
        $region46: #{tpu_custom_call.1} parent=11 // pred_check_branch
          %481 = sbr.rel (%p479) target = $region48
        $region47: #{tpu_custom_call.1} parent=11 // pred_region
          _
        $region48: #{tpu_custom_call.1} parent=11 // pred_fallthru
          _
        // Predicated region
        $region49: #{tpu_custom_call.1} parent=11 // pred_check
          %p482 = pneg %p264
        $region50: #{tpu_custom_call.1} parent=11 // pred_check_branch
          %484 = sbr.rel (%p482) target = $region52
        $region51: #{tpu_custom_call.1} parent=11 // pred_region
          _
        $region52: #{tpu_custom_call.1} parent=11 // pred_fallthru
          _
        // Predicated region
        $region53: #{tpu_custom_call.1} parent=11 // pred_check
          %p485 = pneg %p285
        $region54: #{tpu_custom_call.1} parent=11 // pred_check_branch
          %487 = sbr.rel (%p485) target = $region56
        $region55: #{tpu_custom_call.1} parent=11 // pred_region
          _
        $region56: #{tpu_custom_call.1} parent=11 // pred_fallthru
          _
        // Predicated region
        $region57: #{tpu_custom_call.1} parent=11 // pred_check
          %p488 = pneg %p306
        $region58: #{tpu_custom_call.1} parent=11 // pred_check_branch
          %490 = sbr.rel (%p488) target = $region60
        $region59: #{tpu_custom_call.1} parent=11 // pred_region
          _
        $region60: #{tpu_custom_call.1} parent=11 // pred_fallthru
          _
        // Predicated region
        $region61: #{tpu_custom_call.1} parent=11 // pred_check
          %p491 = pneg %p327
        $region62: #{tpu_custom_call.1} parent=11 // pred_check_branch
          %493 = sbr.rel (%p491) target = $region64
        $region63: #{tpu_custom_call.1} parent=11 // pred_region
          _
        $region64: #{tpu_custom_call.1} parent=11 // pred_fallthru
          _
        // Predicated region
        $region65: #{tpu_custom_call.1} parent=11 // pred_check
          %p494 = pneg %p348
        $region66: #{tpu_custom_call.1} parent=11 // pred_check_branch
          %496 = sbr.rel (%p494) target = $region68
        $region67: #{tpu_custom_call.1} parent=11 // pred_region
          _
        $region68: #{tpu_custom_call.1} parent=11 // pred_fallthru
          _
        // Predicated region
        $region69: #{tpu_custom_call.1} parent=11 // pred_check
          %p497 = pneg %p369
        $region70: #{tpu_custom_call.1} parent=11 // pred_check_branch
          %499 = sbr.rel (%p497) target = $region72
        $region71: #{tpu_custom_call.1} parent=11 // pred_region
          _
        $region72: #{tpu_custom_call.1} parent=11 // pred_fallthru
          _
        // Predicated region
        $region73: #{tpu_custom_call.1} parent=11 // pred_check
          %p500 = pneg %p390
        $region74: #{tpu_custom_call.1} parent=11 // pred_check_branch
          %502 = sbr.rel (%p500) target = $region76
        $region75: #{tpu_custom_call.1} parent=11 // pred_region
          _
        $region76: #{tpu_custom_call.1} parent=11 // pred_fallthru
          _
      $region12: #{tpu_custom_call.1} parent=5 // pred_fallthru
        _
      %p503 = scmp.lt.s32.totalorder %s28, 2
      // Predicated region
      $region77: #{tpu_custom_call.1} parent=5 // pred_check
        %p504 = pneg %p503
      $region78: #{tpu_custom_call.1} parent=5 // pred_check_branch
        %506 = sbr.rel (%p504) target = $region80
      $region79: #{tpu_custom_call.1} parent=5 // pred_region
        // Predicated region
        $region81: #{tpu_custom_call.1} parent=79 // pred_check
          %p507 = pneg %p48
        $region82: #{tpu_custom_call.1} parent=79 // pred_check_branch
          %509 = sbr.rel (%p507) target = $region84
        $region83: #{tpu_custom_call.1} parent=79 // pred_region
          %p510 = scmp.lt.s32.totalorder %s28, 1
          %s511 = scalar_select %p510, %s28, 1
          %s512 = smul.addr %s511, 8
          %s513 = scalar_lea.vmem %s0, %s512
        $region84: #{tpu_custom_call.1} parent=79 // pred_fallthru
          _
      $region80: #{tpu_custom_call.1} parent=5 // pred_fallthru
        _
      %p514 = scmp.le.s32.totalorder 1, %s28
      %p515 = scmp.lt.s32.totalorder %s28, 3
      %p516 = pnand %p514, %p515
      %p517 = pneg %p516
      // Predicated region
      $region85: #{tpu_custom_call.1} parent=5 // pred_check
        _
      $region86: #{tpu_custom_call.1} parent=5 // pred_check_branch
        %519 = sbr.rel (%p516) target = $region88
      $region87: #{tpu_custom_call.1} parent=5 // pred_region
        %s520 = ssub.s32 %s28, 1
        // Predicated region
        $region89: #{tpu_custom_call.1} parent=87 // pred_check
          %p521 = pneg %p180
        $region90: #{tpu_custom_call.1} parent=87 // pred_check_branch
          %523 = sbr.rel (%p521) target = $region92
        $region91: #{tpu_custom_call.1} parent=87 // pred_region
          %524 = dma.done [#allocation3], 16
        $region92: #{tpu_custom_call.1} parent=87 // pred_fallthru
          _
        // Predicated region
        $region93: #{tpu_custom_call.1} parent=87 // pred_check
          %p525 = pneg %p201
        $region94: #{tpu_custom_call.1} parent=87 // pred_check_branch
          %527 = sbr.rel (%p525) target = $region96
        $region95: #{tpu_custom_call.1} parent=87 // pred_region
          %528 = dma.done [#allocation6], 16
        $region96: #{tpu_custom_call.1} parent=87 // pred_fallthru
          _
        // Predicated region
        $region97: #{tpu_custom_call.1} parent=87 // pred_check
          %p529 = pneg %p222
        $region98: #{tpu_custom_call.1} parent=87 // pred_check_branch
          %531 = sbr.rel (%p529) target = $region100
        $region99: #{tpu_custom_call.1} parent=87 // pred_region
          %532 = dma.done [#allocation6], 16
        $region100: #{tpu_custom_call.1} parent=87 // pred_fallthru
          _
        %p533 = scmp.lt.s32.totalorder %s33, 1
        %s534 = scalar_select %p533, %s33, 1
        %s535 = smul.addr %s534, 8
        %s536 = scalar_lea.vmem %s0, %s535
        %p537 = pneg %p54
        %p538 = pneg %p51
        %p539 = pneg %p75
        %p540 = pneg %p72
        %p541 = pneg %p96
        %p542 = pneg %p93
        %p543 = pneg %p117
        %p544 = pneg %p114
        %p545 = pneg %p138
        %p546 = pneg %p135
        %p547 = pneg %p159
        %p548 = pneg %p156
        %p549 = pneg %p180
        %p550 = pneg %p177
        %p551 = pneg %p201
        %p552 = pneg %p198
        %p553 = pneg %p222
        %p554 = pneg %p219
        %p555 = pneg %p243
        %p556 = pneg %p240
        %p557 = pneg %p264
        %p558 = pneg %p261
        %p559 = pneg %p285
        %p560 = pneg %p282
        %p561 = pneg %p306
        %p562 = pneg %p303
        %p563 = pneg %p327
        %p564 = pneg %p324
        %p565 = pneg %p348
        %p566 = pneg %p345
        %p567 = pneg %p369
        %p568 = pneg %p366
        %p569 = pneg %p390
        %p570 = pneg %p387
        %p571 = pneg %p416
        %p572 = pneg %p413
        %s573 = sand.u32 %s403, 1
        %s574 = scalar_lea.sflag [#allocation4], %s573
        %s575 = sand.u32 %s403, 1
        %s576 = smul.addr %s575, 8
        %s577 = scalar_lea.vmem [#allocation8], %s576
        %p578 = scmp.lt.s32.totalorder %s33, 1
        %s579 = scalar_select %p578, %s33, 1
        %s580 = smul.addr %s579, 8
        %s581 = scalar_lea.vmem %s0, %s580
        %v583 = vld [vmem:[%s581] sm:$0xff]
        %v584 = vld [vmem:[%s1] sm:$0x1]
        %v585 = vld [vmem:[%s2] sm:$0x1]
        %vm586 = vcmask 261120
        %v587 = vsel %vm586, %v583, 0.0
        %588 = vadd.xlane.f32.xlu0 %v587
        %v589 = vpop.xlane.xlu0 %588
        %v590 = vrcp.pop 32.0
        %v591 = vmul.f32 %v589, %v590
        %v592 = vsub.f32 %v583, %v591
        %v593 = vmul.f32 %v592, %v592
        %v594 = vsel %vm586, %v593, 0.0
        %595 = vadd.xlane.f32.xlu0 %v594
        %v596 = vpop.xlane.xlu0 %595
        %v597 = vmul.f32 %v596, %v590
        %v598 = vadd.f32 %v597, 1e-05
        %v599 = vrsqrt.pop %v598
        %v600 = vmul.f32 %v592, %v599
        %v602 = vlaneseq
        %v603 = vshrl.u32 %v602, 7
        %v604 = vsub.s32 0, %v603
        %v605 = vrot.slane %v584, %v604
        %v607 = vmul.f32 %v600, %v605
        %v609 = vlaneseq
        %v610 = vshrl.u32 %v609, 7
        %v611 = vsub.s32 0, %v610
        %v612 = vrot.slane %v585, %v611
        %v614 = vadd.f32 %v607, %v612
        %v615 = vpack.c.bf16 %v614, %v614
        %v616 = vld [vmem:[%s3] sm:$0xf]
        %v617 = vld [vmem:[%s3 + $0x4] sm:$0xf]
        %v618 = vld [vmem:[%s3 + $0x8] sm:$0xf]
        %v619 = vld [vmem:[%s3 + $0xc] sm:$0xf]
        %v620 = vld [vmem:[#allocation2] sm:$0x1]
        %v622 = vlaneseq
        %v623 = vshrl.u32 %v622, 7
        %v624 = vsub.s32 0, %v623
        %v625 = vrot.slane %v620, %v624
        %v631 = vunpack.c.l.b16 %v616
        %v632 = vunpack.c.l.b16 %v617
        %v633 = vunpack.c.l.b16 %v618
        %v634 = vunpack.c.l.b16 %v619
        %v635 = vpack.c.b16 %v632, %v631
        %v636 = vpack.c.b16 %v634, %v633
        %v640 = vsel %vm586, %v615, 0
        %642 = vmatprep.subr.bf16.mxu0 0
        %643 = vmatpush1.bf16.msra.mxu0 %v635
        %644 = vmatprep.subr.bf16.mxu0 0
        %645 = vmatpush1.bf16.msra.mxu0 %v636
        %646 = vmatprep.subr.bf16.mxu0 0
        %647 = vmatpush1.bf16.msra.mxu0 0
        %648 = vmatprep.subr.bf16.mxu0 0
        %649 = vmatpush1.bf16.msra.mxu0 0
        %650 = vmatprep.subr.bf16.mxu0 0
        %651 = vmatpush1.bf16.msra.mxu0 0
        %652 = vmatprep.subr.bf16.mxu0 0
        %653 = vmatpush1.bf16.msra.mxu0 0
        %654 = vmatprep.subr.bf16.mxu0 0
        %655 = vmatpush1.bf16.msra.mxu0 0
        %656 = vmatprep.subr.bf16.mxu0 0
        %657 = vmatpush1.bf16.msra.mxu0 0
        %658 = vmatprep.subr.bf16.mxu0 0
        %659 = vmatpush1.bf16.msra.mxu0 0
        %660 = vmatprep.subr.bf16.mxu0 0
        %661 = vmatpush1.bf16.msra.mxu0 0
        %662 = vmatprep.subr.bf16.mxu0 0
        %663 = vmatpush1.bf16.msra.mxu0 0
        %664 = vmatprep.subr.bf16.mxu0 0
        %665 = vmatpush1.bf16.msra.mxu0 0
        %666 = vmatprep.subr.bf16.mxu0 0
        %667 = vmatpush1.bf16.msra.mxu0 0
        %668 = vmatprep.subr.bf16.mxu0 0
        %669 = vmatpush1.bf16.msra.mxu0 0
        %670 = vmatprep.subr.bf16.mxu0 0
        %671 = vmatpush1.bf16.msra.mxu0 0
        %672 = vmatprep.subr.bf16.mxu0 0
        %673 = vmatpush1.bf16.msra.mxu0 0
        %674 = vmatprep.mubr.bf16.mxu0 0
        %675 = vmatmul.mubr.bf16.gmra.mrb[0].mxu0 %v640
        %v676 = vpop.f32.mrb[0].mxu0
        %v677 = vadd.f32 %v625, %v676
        %v678 = vpop.f32.mrb[0].mxu0
        %v679 = vpop.f32.mrb[0].mxu0
        %v680 = vpop.f32.mrb[0].mxu0
        %681 = vdwg.mxu0
        %v682 = vld [vmem:[%s4] sm:$0xf]
        %v683 = vld [vmem:[%s4 + $0x4] sm:$0xf]
        %v684 = vld [vmem:[%s4 + $0x8] sm:$0xf]
        %v685 = vld [vmem:[%s4 + $0xc] sm:$0xf]
        %v686 = vld [vmem:[#allocation5] sm:$0x1]
        %v688 = vlaneseq
        %v689 = vshrl.u32 %v688, 7
        %v690 = vsub.s32 0, %v689
        %v691 = vrot.slane %v686, %v690
        %v697 = vunpack.c.l.b16 %v682
        %v698 = vunpack.c.l.b16 %v683
        %v699 = vunpack.c.l.b16 %v684
        %v700 = vunpack.c.l.b16 %v685
        %v701 = vpack.c.b16 %v698, %v697
        %v702 = vpack.c.b16 %v700, %v699
        %705 = vmatprep.subr.bf16.mxu0 0
        %706 = vmatpush1.bf16.msra.mxu0 %v701
        %707 = vmatprep.subr.bf16.mxu0 0
        %708 = vmatpush1.bf16.msra.mxu0 %v702
        %709 = vmatprep.subr.bf16.mxu0 0
        %710 = vmatpush1.bf16.msra.mxu0 0
        %711 = vmatprep.subr.bf16.mxu0 0
        %712 = vmatpush1.bf16.msra.mxu0 0
        %713 = vmatprep.subr.bf16.mxu0 0
        %714 = vmatpush1.bf16.msra.mxu0 0
        %715 = vmatprep.subr.bf16.mxu0 0
        %716 = vmatpush1.bf16.msra.mxu0 0
        %717 = vmatprep.subr.bf16.mxu0 0
        %718 = vmatpush1.bf16.msra.mxu0 0
        %719 = vmatprep.subr.bf16.mxu0 0
        %720 = vmatpush1.bf16.msra.mxu0 0
        %721 = vmatprep.subr.bf16.mxu0 0
        %722 = vmatpush1.bf16.msra.mxu0 0
        %723 = vmatprep.subr.bf16.mxu0 0
        %724 = vmatpush1.bf16.msra.mxu0 0
        %725 = vmatprep.subr.bf16.mxu0 0
        %726 = vmatpush1.bf16.msra.mxu0 0
        %727 = vmatprep.subr.bf16.mxu0 0
        %728 = vmatpush1.bf16.msra.mxu0 0
        %729 = vmatprep.subr.bf16.mxu0 0
        %730 = vmatpush1.bf16.msra.mxu0 0
        %731 = vmatprep.subr.bf16.mxu0 0
        %732 = vmatpush1.bf16.msra.mxu0 0
        %733 = vmatprep.subr.bf16.mxu0 0
        %734 = vmatpush1.bf16.msra.mxu0 0
        %735 = vmatprep.subr.bf16.mxu0 0
        %736 = vmatpush1.bf16.msra.mxu0 0
        %737 = vmatprep.mubr.bf16.mxu0 0
        %738 = vmatmul.mubr.bf16.gmra.mrb[0].mxu0 %v640
        %v739 = vpop.f32.mrb[0].mxu0
        %v740 = vadd.f32 %v691, %v739
        %v741 = vpop.f32.mrb[0].mxu0
        %v742 = vpop.f32.mrb[0].mxu0
        %v743 = vpop.f32.mrb[0].mxu0
        %744 = vdwg.mxu0
        %v745 = vld [vmem:[%s5] sm:$0xf]
        %v746 = vld [vmem:[%s5 + $0x4] sm:$0xf]
        %v747 = vld [vmem:[%s5 + $0x8] sm:$0xf]
        %v748 = vld [vmem:[%s5 + $0xc] sm:$0xf]
        %v749 = vld [vmem:[#allocation7] sm:$0x1]
        %v751 = vlaneseq
        %v752 = vshrl.u32 %v751, 7
        %v753 = vsub.s32 0, %v752
        %v754 = vrot.slane %v749, %v753
        %v760 = vunpack.c.l.b16 %v745
        %v761 = vunpack.c.l.b16 %v746
        %v762 = vunpack.c.l.b16 %v747
        %v763 = vunpack.c.l.b16 %v748
        %v764 = vpack.c.b16 %v761, %v760
        %v765 = vpack.c.b16 %v763, %v762
        %768 = vmatprep.subr.bf16.mxu0 0
        %769 = vmatpush1.bf16.msra.mxu0 %v764
        %770 = vmatprep.subr.bf16.mxu0 0
        %771 = vmatpush1.bf16.msra.mxu0 %v765
        %772 = vmatprep.subr.bf16.mxu0 0
        %773 = vmatpush1.bf16.msra.mxu0 0
        %774 = vmatprep.subr.bf16.mxu0 0
        %775 = vmatpush1.bf16.msra.mxu0 0
        %776 = vmatprep.subr.bf16.mxu0 0
        %777 = vmatpush1.bf16.msra.mxu0 0
        %778 = vmatprep.subr.bf16.mxu0 0
        %779 = vmatpush1.bf16.msra.mxu0 0
        %780 = vmatprep.subr.bf16.mxu0 0
        %781 = vmatpush1.bf16.msra.mxu0 0
        %782 = vmatprep.subr.bf16.mxu0 0
        %783 = vmatpush1.bf16.msra.mxu0 0
        %784 = vmatprep.subr.bf16.mxu0 0
        %785 = vmatpush1.bf16.msra.mxu0 0
        %786 = vmatprep.subr.bf16.mxu0 0
        %787 = vmatpush1.bf16.msra.mxu0 0
        %788 = vmatprep.subr.bf16.mxu0 0
        %789 = vmatpush1.bf16.msra.mxu0 0
        %790 = vmatprep.subr.bf16.mxu0 0
        %791 = vmatpush1.bf16.msra.mxu0 0
        %792 = vmatprep.subr.bf16.mxu0 0
        %793 = vmatpush1.bf16.msra.mxu0 0
        %794 = vmatprep.subr.bf16.mxu0 0
        %795 = vmatpush1.bf16.msra.mxu0 0
        %796 = vmatprep.subr.bf16.mxu0 0
        %797 = vmatpush1.bf16.msra.mxu0 0
        %798 = vmatprep.subr.bf16.mxu0 0
        %799 = vmatpush1.bf16.msra.mxu0 0
        %800 = vmatprep.mubr.bf16.mxu0 0
        %801 = vmatmul.mubr.bf16.gmra.mrb[0].mxu0 %v640
        %v802 = vpop.f32.mrb[0].mxu0
        %v803 = vadd.f32 %v754, %v802
        %v804 = vpop.f32.mrb[0].mxu0
        %v805 = vpop.f32.mrb[0].mxu0
        %v806 = vpop.f32.mrb[0].mxu0
        %807 = vdwg.mxu0
        %v808 = vmul.f32 %v677, 0.35355338
        %v809 = vpack.c.bf16 %v808, %v808
        %v810 = vpack.c.bf16 %v740, %v740
        %v811 = vpack.c.bf16 %v803, %v803
        %vm812 = vcmask 64512
        %v814 = vsel %vm812, %v809, 0
        %v817 = vsel %vm812, %v810, 0
        %819 = vmatprep.subr.bf16.mxu0 0
        %820 = vmatpush1.bf16.xpose.msra.mxu0 %v817
        %821 = vmatprep.subr.bf16.mxu0 0
        %822 = vmatpush1.bf16.xpose.msra.mxu0 0
        %823 = vmatprep.subr.bf16.mxu0 0
        %824 = vmatpush1.bf16.xpose.msra.mxu0 0
        %825 = vmatprep.subr.bf16.mxu0 0
        %826 = vmatpush1.bf16.xpose.msra.mxu0 0
        %827 = vmatprep.subr.bf16.mxu0 0
        %828 = vmatpush1.bf16.xpose.msra.mxu0 0
        %829 = vmatprep.subr.bf16.mxu0 0
        %830 = vmatpush1.bf16.xpose.msra.mxu0 0
        %831 = vmatprep.subr.bf16.mxu0 0
        %832 = vmatpush1.bf16.xpose.msra.mxu0 0
        %833 = vmatprep.subr.bf16.mxu0 0
        %834 = vmatpush1.bf16.xpose.msra.mxu0 0
        %835 = vmatprep.subr.bf16.mxu0 0
        %836 = vmatpush1.bf16.xpose.msra.mxu0 0
        %837 = vmatprep.subr.bf16.mxu0 0
        %838 = vmatpush1.bf16.xpose.msra.mxu0 0
        %839 = vmatprep.subr.bf16.mxu0 0
        %840 = vmatpush1.bf16.xpose.msra.mxu0 0
        %841 = vmatprep.subr.bf16.mxu0 0
        %842 = vmatpush1.bf16.xpose.msra.mxu0 0
        %843 = vmatprep.subr.bf16.mxu0 0
        %844 = vmatpush1.bf16.xpose.msra.mxu0 0
        %845 = vmatprep.subr.bf16.mxu0 0
        %846 = vmatpush1.bf16.xpose.msra.mxu0 0
        %847 = vmatprep.subr.bf16.mxu0 0
        %848 = vmatpush1.bf16.xpose.msra.mxu0 0
        %849 = vmatprep.subr.bf16.mxu0 0
        %850 = vmatpush1.bf16.xpose.msra.mxu0 0
        %851 = vmatprep.mubr.bf16.mxu0 0
        %852 = vmatmul.mubr.bf16.gmra.mrb[0].mxu0 %v814
        %v853 = vpop.f32.mrb[0].mxu0
        %v854 = vadd.f32 0.0, %v853
        %v855 = vpop.f32.mrb[0].mxu0
        %v856 = vpop.f32.mrb[0].mxu0
        %v857 = vpop.f32.mrb[0].mxu0
        %858 = vdwg.mxu0
        %v859 = vsel %vm812, %v854, -inf
        %860 = vmax.xlane.f32.xlu0 %v859
        %v861 = vpop.xlane.xlu0 %860
        %v862 = vsub.f32 %v854, %v861
        %v863 = vmul.f32 %v862, 1.442695
        %v864 = vpow.pop %v863
        %v865 = vsel %vm812, %v864, 0.0
        %866 = vadd.xlane.f32.xlu0 %v865
        %v867 = vpop.xlane.xlu0 %866
        %v868 = vrcp.pop %v867
        %v869 = vmul.f32 %v864, %v868
        %v870 = vpack.c.bf16 %v869, %v869
        %v872 = vsel %vm812, %v870, 0
        %vm874 = vcmask 1043456
        %v876 = vsel %vm874, %v811, 0
        %878 = vmatprep.subr.bf16.mxu0 0
        %879 = vmatpush1.bf16.msra.mxu0 %v876
        %880 = vmatprep.subr.bf16.mxu0 0
        %881 = vmatpush1.bf16.msra.mxu0 0
        %882 = vmatprep.subr.bf16.mxu0 0
        %883 = vmatpush1.bf16.msra.mxu0 0
        %884 = vmatprep.subr.bf16.mxu0 0
        %885 = vmatpush1.bf16.msra.mxu0 0
        %886 = vmatprep.subr.bf16.mxu0 0
        %887 = vmatpush1.bf16.msra.mxu0 0
        %888 = vmatprep.subr.bf16.mxu0 0
        %889 = vmatpush1.bf16.msra.mxu0 0
        %890 = vmatprep.subr.bf16.mxu0 0
        %891 = vmatpush1.bf16.msra.mxu0 0
        %892 = vmatprep.subr.bf16.mxu0 0
        %893 = vmatpush1.bf16.msra.mxu0 0
        %894 = vmatprep.subr.bf16.mxu0 0
        %895 = vmatpush1.bf16.msra.mxu0 0
        %896 = vmatprep.subr.bf16.mxu0 0
        %897 = vmatpush1.bf16.msra.mxu0 0
        %898 = vmatprep.subr.bf16.mxu0 0
        %899 = vmatpush1.bf16.msra.mxu0 0
        %900 = vmatprep.subr.bf16.mxu0 0
        %901 = vmatpush1.bf16.msra.mxu0 0
        %902 = vmatprep.subr.bf16.mxu0 0
        %903 = vmatpush1.bf16.msra.mxu0 0
        %904 = vmatprep.subr.bf16.mxu0 0
        %905 = vmatpush1.bf16.msra.mxu0 0
        %906 = vmatprep.subr.bf16.mxu0 0
        %907 = vmatpush1.bf16.msra.mxu0 0
        %908 = vmatprep.subr.bf16.mxu0 0
        %909 = vmatpush1.bf16.msra.mxu0 0
        %910 = vmatprep.mubr.bf16.mxu0 0
        %911 = vmatmul.mubr.bf16.gmra.mrb[0].mxu0 %v872
        %v912 = vpop.f32.mrb[0].mxu0
        %v913 = vadd.f32 0.0, %v912
        %v914 = vpop.f32.mrb[0].mxu0
        %v915 = vpop.f32.mrb[0].mxu0
        %v916 = vpop.f32.mrb[0].mxu0
        %917 = vdwg.mxu0
        %919 = vrot.lane.b32.xlu0 %v809, 120
        %v920 = vpop.permute.xlu0 %919
        %922 = vrot.lane.b32.xlu0 %v810, 120
        %v923 = vpop.permute.xlu0 %922
        %v925 = vsel %vm812, %v920, 0
        %v928 = vsel %vm812, %v923, 0
        %930 = vmatprep.subr.bf16.mxu0 0
        %931 = vmatpush1.bf16.xpose.msra.mxu0 %v928
        %932 = vmatprep.subr.bf16.mxu0 0
        %933 = vmatpush1.bf16.xpose.msra.mxu0 0
        %934 = vmatprep.subr.bf16.mxu0 0
        %935 = vmatpush1.bf16.xpose.msra.mxu0 0
        %936 = vmatprep.subr.bf16.mxu0 0
        %937 = vmatpush1.bf16.xpose.msra.mxu0 0
        %938 = vmatprep.subr.bf16.mxu0 0
        %939 = vmatpush1.bf16.xpose.msra.mxu0 0
        %940 = vmatprep.subr.bf16.mxu0 0
        %941 = vmatpush1.bf16.xpose.msra.mxu0 0
        %942 = vmatprep.subr.bf16.mxu0 0
        %943 = vmatpush1.bf16.xpose.msra.mxu0 0
        %944 = vmatprep.subr.bf16.mxu0 0
        %945 = vmatpush1.bf16.xpose.msra.mxu0 0
        %946 = vmatprep.subr.bf16.mxu0 0
        %947 = vmatpush1.bf16.xpose.msra.mxu0 0
        %948 = vmatprep.subr.bf16.mxu0 0
        %949 = vmatpush1.bf16.xpose.msra.mxu0 0
        %950 = vmatprep.subr.bf16.mxu0 0
        %951 = vmatpush1.bf16.xpose.msra.mxu0 0
        %952 = vmatprep.subr.bf16.mxu0 0
        %953 = vmatpush1.bf16.xpose.msra.mxu0 0
        %954 = vmatprep.subr.bf16.mxu0 0
        %955 = vmatpush1.bf16.xpose.msra.mxu0 0
        %956 = vmatprep.subr.bf16.mxu0 0
        %957 = vmatpush1.bf16.xpose.msra.mxu0 0
        %958 = vmatprep.subr.bf16.mxu0 0
        %959 = vmatpush1.bf16.xpose.msra.mxu0 0
        %960 = vmatprep.subr.bf16.mxu0 0
        %961 = vmatpush1.bf16.xpose.msra.mxu0 0
        %962 = vmatprep.mubr.bf16.mxu0 0
        %963 = vmatmul.mubr.bf16.gmra.mrb[0].mxu0 %v925
        %v964 = vpop.f32.mrb[0].mxu0
        %v965 = vadd.f32 0.0, %v964
        %v966 = vpop.f32.mrb[0].mxu0
        %v967 = vpop.f32.mrb[0].mxu0
        %v968 = vpop.f32.mrb[0].mxu0
        %969 = vdwg.mxu0
        %v970 = vsel %vm812, %v965, -inf
        %971 = vmax.xlane.f32.xlu0 %v970
        %v972 = vpop.xlane.xlu0 %971
        %v973 = vsub.f32 %v965, %v972
        %v974 = vmul.f32 %v973, 1.442695
        %v975 = vpow.pop %v974
        %v976 = vsel %vm812, %v975, 0.0
        %977 = vadd.xlane.f32.xlu0 %v976
        %v978 = vpop.xlane.xlu0 %977
        %v979 = vrcp.pop %v978
        %v980 = vmul.f32 %v975, %v979
        %v981 = vpack.c.bf16 %v980, %v980
        %983 = vrot.lane.b32.xlu0 %v811, 120
        %v984 = vpop.permute.xlu0 %983
        %v986 = vsel %vm812, %v981, 0
        %v989 = vsel %vm874, %v984, 0
        %991 = vmatprep.subr.bf16.mxu0 0
        %992 = vmatpush1.bf16.msra.mxu0 %v989
        %993 = vmatprep.subr.bf16.mxu0 0
        %994 = vmatpush1.bf16.msra.mxu0 0
        %995 = vmatprep.subr.bf16.mxu0 0
        %996 = vmatpush1.bf16.msra.mxu0 0
        %997 = vmatprep.subr.bf16.mxu0 0
        %998 = vmatpush1.bf16.msra.mxu0 0
        %999 = vmatprep.subr.bf16.mxu0 0
        %1000 = vmatpush1.bf16.msra.mxu0 0
        %1001 = vmatprep.subr.bf16.mxu0 0
        %1002 = vmatpush1.bf16.msra.mxu0 0
        %1003 = vmatprep.subr.bf16.mxu0 0
        %1004 = vmatpush1.bf16.msra.mxu0 0
        %1005 = vmatprep.subr.bf16.mxu0 0
        %1006 = vmatpush1.bf16.msra.mxu0 0
        %1007 = vmatprep.subr.bf16.mxu0 0
        %1008 = vmatpush1.bf16.msra.mxu0 0
        %1009 = vmatprep.subr.bf16.mxu0 0
        %1010 = vmatpush1.bf16.msra.mxu0 0
        %1011 = vmatprep.subr.bf16.mxu0 0
        %1012 = vmatpush1.bf16.msra.mxu0 0
        %1013 = vmatprep.subr.bf16.mxu0 0
        %1014 = vmatpush1.bf16.msra.mxu0 0
        %1015 = vmatprep.subr.bf16.mxu0 0
        %1016 = vmatpush1.bf16.msra.mxu0 0
        %1017 = vmatprep.subr.bf16.mxu0 0
        %1018 = vmatpush1.bf16.msra.mxu0 0
        %1019 = vmatprep.subr.bf16.mxu0 0
        %1020 = vmatpush1.bf16.msra.mxu0 0
        %1021 = vmatprep.subr.bf16.mxu0 0
        %1022 = vmatpush1.bf16.msra.mxu0 0
        %1023 = vmatprep.mubr.bf16.mxu0 0
        %1024 = vmatmul.mubr.bf16.gmra.mrb[0].mxu0 %v986
        %v1025 = vpop.f32.mrb[0].mxu0
        %v1026 = vadd.f32 0.0, %v1025
        %v1027 = vpop.f32.mrb[0].mxu0
        %v1028 = vpop.f32.mrb[0].mxu0
        %v1029 = vpop.f32.mrb[0].mxu0
        %1030 = vdwg.mxu0
        %1031 = vrot.lane.b32.xlu0 %v809, 112
        %v1032 = vpop.permute.xlu0 %1031
        %1033 = vrot.lane.b32.xlu0 %v810, 112
        %v1034 = vpop.permute.xlu0 %1033
        %v1036 = vsel %vm812, %v1032, 0
        %v1039 = vsel %vm812, %v1034, 0
        %1041 = vmatprep.subr.bf16.mxu0 0
        %1042 = vmatpush1.bf16.xpose.msra.mxu0 %v1039
        %1043 = vmatprep.subr.bf16.mxu0 0
        %1044 = vmatpush1.bf16.xpose.msra.mxu0 0
        %1045 = vmatprep.subr.bf16.mxu0 0
        %1046 = vmatpush1.bf16.xpose.msra.mxu0 0
        %1047 = vmatprep.subr.bf16.mxu0 0
        %1048 = vmatpush1.bf16.xpose.msra.mxu0 0
        %1049 = vmatprep.subr.bf16.mxu0 0
        %1050 = vmatpush1.bf16.xpose.msra.mxu0 0
        %1051 = vmatprep.subr.bf16.mxu0 0
        %1052 = vmatpush1.bf16.xpose.msra.mxu0 0
        %1053 = vmatprep.subr.bf16.mxu0 0
        %1054 = vmatpush1.bf16.xpose.msra.mxu0 0
        %1055 = vmatprep.subr.bf16.mxu0 0
        %1056 = vmatpush1.bf16.xpose.msra.mxu0 0
        %1057 = vmatprep.subr.bf16.mxu0 0
        %1058 = vmatpush1.bf16.xpose.msra.mxu0 0
        %1059 = vmatprep.subr.bf16.mxu0 0
        %1060 = vmatpush1.bf16.xpose.msra.mxu0 0
        %1061 = vmatprep.subr.bf16.mxu0 0
        %1062 = vmatpush1.bf16.xpose.msra.mxu0 0
        %1063 = vmatprep.subr.bf16.mxu0 0
        %1064 = vmatpush1.bf16.xpose.msra.mxu0 0
        %1065 = vmatprep.subr.bf16.mxu0 0
        %1066 = vmatpush1.bf16.xpose.msra.mxu0 0
        %1067 = vmatprep.subr.bf16.mxu0 0
        %1068 = vmatpush1.bf16.xpose.msra.mxu0 0
        %1069 = vmatprep.subr.bf16.mxu0 0
        %1070 = vmatpush1.bf16.xpose.msra.mxu0 0
        %1071 = vmatprep.subr.bf16.mxu0 0
        %1072 = vmatpush1.bf16.xpose.msra.mxu0 0
        %1073 = vmatprep.mubr.bf16.mxu0 0
        %1074 = vmatmul.mubr.bf16.gmra.mrb[0].mxu0 %v1036
        %v1075 = vpop.f32.mrb[0].mxu0
        %v1076 = vadd.f32 0.0, %v1075
        %v1077 = vpop.f32.mrb[0].mxu0
        %v1078 = vpop.f32.mrb[0].mxu0
        %v1079 = vpop.f32.mrb[0].mxu0
        %1080 = vdwg.mxu0
        %v1081 = vsel %vm812, %v1076, -inf
        %1082 = vmax.xlane.f32.xlu0 %v1081
        %v1083 = vpop.xlane.xlu0 %1082
        %v1084 = vsub.f32 %v1076, %v1083
        %v1085 = vmul.f32 %v1084, 1.442695
        %v1086 = vpow.pop %v1085
        %v1087 = vsel %vm812, %v1086, 0.0
        %1088 = vadd.xlane.f32.xlu0 %v1087
        %v1089 = vpop.xlane.xlu0 %1088
        %v1090 = vrcp.pop %v1089
        %v1091 = vmul.f32 %v1086, %v1090
        %v1092 = vpack.c.bf16 %v1091, %v1091
        %1093 = vrot.lane.b32.xlu0 %v811, 112
        %v1094 = vpop.permute.xlu0 %1093
        %v1096 = vsel %vm812, %v1092, 0
        %v1099 = vsel %vm874, %v1094, 0
        %1101 = vmatprep.subr.bf16.mxu0 0
        %1102 = vmatpush1.bf16.msra.mxu0 %v1099
        %1103 = vmatprep.subr.bf16.mxu0 0
        %1104 = vmatpush1.bf16.msra.mxu0 0
        %1105 = vmatprep.subr.bf16.mxu0 0
        %1106 = vmatpush1.bf16.msra.mxu0 0
        %1107 = vmatprep.subr.bf16.mxu0 0
        %1108 = vmatpush1.bf16.msra.mxu0 0
        %1109 = vmatprep.subr.bf16.mxu0 0
        %1110 = vmatpush1.bf16.msra.mxu0 0
        %1111 = vmatprep.subr.bf16.mxu0 0
        %1112 = vmatpush1.bf16.msra.mxu0 0
        %1113 = vmatprep.subr.bf16.mxu0 0
        %1114 = vmatpush1.bf16.msra.mxu0 0
        %1115 = vmatprep.subr.bf16.mxu0 0
        %1116 = vmatpush1.bf16.msra.mxu0 0
        %1117 = vmatprep.subr.bf16.mxu0 0
        %1118 = vmatpush1.bf16.msra.mxu0 0
        %1119 = vmatprep.subr.bf16.mxu0 0
        %1120 = vmatpush1.bf16.msra.mxu0 0
        %1121 = vmatprep.subr.bf16.mxu0 0
        %1122 = vmatpush1.bf16.msra.mxu0 0
        %1123 = vmatprep.subr.bf16.mxu0 0
        %1124 = vmatpush1.bf16.msra.mxu0 0
        %1125 = vmatprep.subr.bf16.mxu0 0
        %1126 = vmatpush1.bf16.msra.mxu0 0
        %1127 = vmatprep.subr.bf16.mxu0 0
        %1128 = vmatpush1.bf16.msra.mxu0 0
        %1129 = vmatprep.subr.bf16.mxu0 0
        %1130 = vmatpush1.bf16.msra.mxu0 0
        %1131 = vmatprep.subr.bf16.mxu0 0
        %1132 = vmatpush1.bf16.msra.mxu0 0
        %1133 = vmatprep.mubr.bf16.mxu0 0
        %1134 = vmatmul.mubr.bf16.gmra.mrb[0].mxu0 %v1096
        %v1135 = vpop.f32.mrb[0].mxu0
        %v1136 = vadd.f32 0.0, %v1135
        %v1137 = vpop.f32.mrb[0].mxu0
        %v1138 = vpop.f32.mrb[0].mxu0
        %v1139 = vpop.f32.mrb[0].mxu0
        %1140 = vdwg.mxu0
        %1141 = vrot.lane.b32.xlu0 %v809, 104
        %v1142 = vpop.permute.xlu0 %1141
        %1143 = vrot.lane.b32.xlu0 %v810, 104
        %v1144 = vpop.permute.xlu0 %1143
        %v1146 = vsel %vm812, %v1142, 0
        %v1149 = vsel %vm812, %v1144, 0
        %1151 = vmatprep.subr.bf16.mxu0 0
        %1152 = vmatpush1.bf16.xpose.msra.mxu0 %v1149
        %1153 = vmatprep.subr.bf16.mxu0 0
        %1154 = vmatpush1.bf16.xpose.msra.mxu0 0
        %1155 = vmatprep.subr.bf16.mxu0 0
        %1156 = vmatpush1.bf16.xpose.msra.mxu0 0
        %1157 = vmatprep.subr.bf16.mxu0 0
        %1158 = vmatpush1.bf16.xpose.msra.mxu0 0
        %1159 = vmatprep.subr.bf16.mxu0 0
        %1160 = vmatpush1.bf16.xpose.msra.mxu0 0
        %1161 = vmatprep.subr.bf16.mxu0 0
        %1162 = vmatpush1.bf16.xpose.msra.mxu0 0
        %1163 = vmatprep.subr.bf16.mxu0 0
        %1164 = vmatpush1.bf16.xpose.msra.mxu0 0
        %1165 = vmatprep.subr.bf16.mxu0 0
        %1166 = vmatpush1.bf16.xpose.msra.mxu0 0
        %1167 = vmatprep.subr.bf16.mxu0 0
        %1168 = vmatpush1.bf16.xpose.msra.mxu0 0
        %1169 = vmatprep.subr.bf16.mxu0 0
        %1170 = vmatpush1.bf16.xpose.msra.mxu0 0
        %1171 = vmatprep.subr.bf16.mxu0 0
        %1172 = vmatpush1.bf16.xpose.msra.mxu0 0
        %1173 = vmatprep.subr.bf16.mxu0 0
        %1174 = vmatpush1.bf16.xpose.msra.mxu0 0
        %1175 = vmatprep.subr.bf16.mxu0 0
        %1176 = vmatpush1.bf16.xpose.msra.mxu0 0
        %1177 = vmatprep.subr.bf16.mxu0 0
        %1178 = vmatpush1.bf16.xpose.msra.mxu0 0
        %1179 = vmatprep.subr.bf16.mxu0 0
        %1180 = vmatpush1.bf16.xpose.msra.mxu0 0
        %1181 = vmatprep.subr.bf16.mxu0 0
        %1182 = vmatpush1.bf16.xpose.msra.mxu0 0
        %1183 = vmatprep.mubr.bf16.mxu0 0
        %1184 = vmatmul.mubr.bf16.gmra.mrb[0].mxu0 %v1146
        %v1185 = vpop.f32.mrb[0].mxu0
        %v1186 = vadd.f32 0.0, %v1185
        %v1187 = vpop.f32.mrb[0].mxu0
        %v1188 = vpop.f32.mrb[0].mxu0
        %v1189 = vpop.f32.mrb[0].mxu0
        %1190 = vdwg.mxu0
        %v1191 = vsel %vm812, %v1186, -inf
        %1192 = vmax.xlane.f32.xlu0 %v1191
        %v1193 = vpop.xlane.xlu0 %1192
        %v1194 = vsub.f32 %v1186, %v1193
        %v1195 = vmul.f32 %v1194, 1.442695
        %v1196 = vpow.pop %v1195
        %v1197 = vsel %vm812, %v1196, 0.0
        %1198 = vadd.xlane.f32.xlu0 %v1197
        %v1199 = vpop.xlane.xlu0 %1198
        %v1200 = vrcp.pop %v1199
        %v1201 = vmul.f32 %v1196, %v1200
        %v1202 = vpack.c.bf16 %v1201, %v1201
        %1203 = vrot.lane.b32.xlu0 %v811, 104
        %v1204 = vpop.permute.xlu0 %1203
        %v1206 = vsel %vm812, %v1202, 0
        %v1209 = vsel %vm874, %v1204, 0
        %1211 = vmatprep.subr.bf16.mxu0 0
        %1212 = vmatpush1.bf16.msra.mxu0 %v1209
        %1213 = vmatprep.subr.bf16.mxu0 0
        %1214 = vmatpush1.bf16.msra.mxu0 0
        %1215 = vmatprep.subr.bf16.mxu0 0
        %1216 = vmatpush1.bf16.msra.mxu0 0
        %1217 = vmatprep.subr.bf16.mxu0 0
        %1218 = vmatpush1.bf16.msra.mxu0 0
        %1219 = vmatprep.subr.bf16.mxu0 0
        %1220 = vmatpush1.bf16.msra.mxu0 0
        %1221 = vmatprep.subr.bf16.mxu0 0
        %1222 = vmatpush1.bf16.msra.mxu0 0
        %1223 = vmatprep.subr.bf16.mxu0 0
        %1224 = vmatpush1.bf16.msra.mxu0 0
        %1225 = vmatprep.subr.bf16.mxu0 0
        %1226 = vmatpush1.bf16.msra.mxu0 0
        %1227 = vmatprep.subr.bf16.mxu0 0
        %1228 = vmatpush1.bf16.msra.mxu0 0
        %1229 = vmatprep.subr.bf16.mxu0 0
        %1230 = vmatpush1.bf16.msra.mxu0 0
        %1231 = vmatprep.subr.bf16.mxu0 0
        %1232 = vmatpush1.bf16.msra.mxu0 0
        %1233 = vmatprep.subr.bf16.mxu0 0
        %1234 = vmatpush1.bf16.msra.mxu0 0
        %1235 = vmatprep.subr.bf16.mxu0 0
        %1236 = vmatpush1.bf16.msra.mxu0 0
        %1237 = vmatprep.subr.bf16.mxu0 0
        %1238 = vmatpush1.bf16.msra.mxu0 0
        %1239 = vmatprep.subr.bf16.mxu0 0
        %1240 = vmatpush1.bf16.msra.mxu0 0
        %1241 = vmatprep.subr.bf16.mxu0 0
        %1242 = vmatpush1.bf16.msra.mxu0 0
        %1243 = vmatprep.mubr.bf16.mxu0 0
        %1244 = vmatmul.mubr.bf16.gmra.mrb[0].mxu0 %v1206
        %v1245 = vpop.f32.mrb[0].mxu0
        %v1246 = vadd.f32 0.0, %v1245
        %v1247 = vpop.f32.mrb[0].mxu0
        %v1248 = vpop.f32.mrb[0].mxu0
        %v1249 = vpop.f32.mrb[0].mxu0
        %1250 = vdwg.mxu0
        %1252 = vrot.lane.b32.xlu0 %v1026, 8
        %v1253 = vpop.permute.xlu0 %1252
        %1256 = vrot.lane.b32.xlu0 %v1136, 16
        %v1257 = vpop.permute.xlu0 %1256
        %1260 = vrot.lane.b32.xlu0 %v1246, 24
        %v1261 = vpop.permute.xlu0 %1260
        %v1263 = vsel %vm812, %v913, %v1253
        %vm1264 = vcmask 130048
        %v1265 = vsel %vm1264, %v1263, %v1257
        %vm1266 = vcmask 195584
        %v1267 = vsel %vm1266, %v1265, %v1261
        %v1268 = vpack.c.bf16 %v1267, %v1267
        %v1269 = vld [vmem:[%s9] sm:$0xf]
        %v1270 = vld [vmem:[%s9 + $0x4] sm:$0xf]
        %v1271 = vld [vmem:[%s9 + $0x8] sm:$0xf]
        %v1272 = vld [vmem:[%s9 + $0xc] sm:$0xf]
        %v1273 = vld [vmem:[%s10] sm:$0x1]
        %v1275 = vlaneseq
        %v1276 = vshrl.u32 %v1275, 7
        %v1277 = vsub.s32 0, %v1276
        %v1278 = vrot.slane %v1273, %v1277
        %v1284 = vunpack.c.l.b16 %v1269
        %v1285 = vunpack.c.l.b16 %v1270
        %v1286 = vunpack.c.l.b16 %v1271
        %v1287 = vunpack.c.l.b16 %v1272
        %v1288 = vpack.c.b16 %v1285, %v1284
        %v1289 = vpack.c.b16 %v1287, %v1286
        %v1293 = vsel %vm586, %v1268, 0
        %1295 = vmatprep.subr.bf16.mxu0 0
        %1296 = vmatpush1.bf16.msra.mxu0 %v1288
        %1297 = vmatprep.subr.bf16.mxu0 0
        %1298 = vmatpush1.bf16.msra.mxu0 %v1289
        %1299 = vmatprep.subr.bf16.mxu0 0
        %1300 = vmatpush1.bf16.msra.mxu0 0
        %1301 = vmatprep.subr.bf16.mxu0 0
        %1302 = vmatpush1.bf16.msra.mxu0 0
        %1303 = vmatprep.subr.bf16.mxu0 0
        %1304 = vmatpush1.bf16.msra.mxu0 0
        %1305 = vmatprep.subr.bf16.mxu0 0
        %1306 = vmatpush1.bf16.msra.mxu0 0
        %1307 = vmatprep.subr.bf16.mxu0 0
        %1308 = vmatpush1.bf16.msra.mxu0 0
        %1309 = vmatprep.subr.bf16.mxu0 0
        %1310 = vmatpush1.bf16.msra.mxu0 0
        %1311 = vmatprep.subr.bf16.mxu0 0
        %1312 = vmatpush1.bf16.msra.mxu0 0
        %1313 = vmatprep.subr.bf16.mxu0 0
        %1314 = vmatpush1.bf16.msra.mxu0 0
        %1315 = vmatprep.subr.bf16.mxu0 0
        %1316 = vmatpush1.bf16.msra.mxu0 0
        %1317 = vmatprep.subr.bf16.mxu0 0
        %1318 = vmatpush1.bf16.msra.mxu0 0
        %1319 = vmatprep.subr.bf16.mxu0 0
        %1320 = vmatpush1.bf16.msra.mxu0 0
        %1321 = vmatprep.subr.bf16.mxu0 0
        %1322 = vmatpush1.bf16.msra.mxu0 0
        %1323 = vmatprep.subr.bf16.mxu0 0
        %1324 = vmatpush1.bf16.msra.mxu0 0
        %1325 = vmatprep.subr.bf16.mxu0 0
        %1326 = vmatpush1.bf16.msra.mxu0 0
        %1327 = vmatprep.mubr.bf16.mxu0 0
        %1328 = vmatmul.mubr.bf16.gmra.mrb[0].mxu0 %v1293
        %v1329 = vpop.f32.mrb[0].mxu0
        %v1330 = vadd.f32 %v1278, %v1329
        %v1331 = vpop.f32.mrb[0].mxu0
        %v1332 = vpop.f32.mrb[0].mxu0
        %v1333 = vpop.f32.mrb[0].mxu0
        %1334 = vdwg.mxu0
        %v1335 = vadd.f32 %v583, %v1330
        %v1336 = vld [vmem:[%s11] sm:$0x1]
        %v1337 = vld [vmem:[%s12] sm:$0x1]
        %v1338 = vsel %vm586, %v1335, 0.0
        %1339 = vadd.xlane.f32.xlu0 %v1338
        %v1340 = vpop.xlane.xlu0 %1339
        %v1341 = vmul.f32 %v1340, %v590
        %v1342 = vsub.f32 %v1335, %v1341
        %v1343 = vmul.f32 %v1342, %v1342
        %v1344 = vsel %vm586, %v1343, 0.0
        %1345 = vadd.xlane.f32.xlu0 %v1344
        %v1346 = vpop.xlane.xlu0 %1345
        %v1347 = vmul.f32 %v1346, %v590
        %v1348 = vadd.f32 %v1347, 1e-05
        %v1349 = vrsqrt.pop %v1348
        %v1350 = vmul.f32 %v1342, %v1349
        %v1352 = vlaneseq
        %v1353 = vshrl.u32 %v1352, 7
        %v1354 = vsub.s32 0, %v1353
        %v1355 = vrot.slane %v1336, %v1354
        %v1357 = vmul.f32 %v1350, %v1355
        %v1359 = vlaneseq
        %v1360 = vshrl.u32 %v1359, 7
        %v1361 = vsub.s32 0, %v1360
        %v1362 = vrot.slane %v1337, %v1361
        %v1364 = vadd.f32 %v1357, %v1362
        %v1365 = vpack.c.bf16 %v1364, %v1364
        %v1366 = vld [vmem:[%s13] sm:$0xf]
        %v1367 = vld [vmem:[%s13 + $0x4] sm:$0xf]
        %v1368 = vld [vmem:[%s13 + $0x8] sm:$0xf]
        %v1369 = vld [vmem:[%s13 + $0xc] sm:$0xf]
        %v1370 = vld [vmem:[%s14] sm:$0x1]
        %v1372 = vlaneseq
        %v1373 = vshrl.u32 %v1372, 7
        %v1374 = vsub.s32 0, %v1373
        %v1375 = vrot.slane %v1370, %v1374
        %v1381 = vunpack.c.l.b16 %v1366
        %v1382 = vunpack.c.l.b16 %v1367
        %v1383 = vunpack.c.l.b16 %v1368
        %v1384 = vunpack.c.l.b16 %v1369
        %v1385 = vpack.c.b16 %v1382, %v1381
        %v1386 = vpack.c.b16 %v1384, %v1383
        %v1390 = vsel %vm586, %v1365, 0
        %1392 = vmatprep.subr.bf16.mxu0 0
        %1393 = vmatpush1.bf16.msra.mxu0 %v1385
        %1394 = vmatprep.subr.bf16.mxu0 0
        %1395 = vmatpush1.bf16.msra.mxu0 %v1386
        %1396 = vmatprep.subr.bf16.mxu0 0
        %1397 = vmatpush1.bf16.msra.mxu0 0
        %1398 = vmatprep.subr.bf16.mxu0 0
        %1399 = vmatpush1.bf16.msra.mxu0 0
        %1400 = vmatprep.subr.bf16.mxu0 0
        %1401 = vmatpush1.bf16.msra.mxu0 0
        %1402 = vmatprep.subr.bf16.mxu0 0
        %1403 = vmatpush1.bf16.msra.mxu0 0
        %1404 = vmatprep.subr.bf16.mxu0 0
        %1405 = vmatpush1.bf16.msra.mxu0 0
        %1406 = vmatprep.subr.bf16.mxu0 0
        %1407 = vmatpush1.bf16.msra.mxu0 0
        %1408 = vmatprep.subr.bf16.mxu0 0
        %1409 = vmatpush1.bf16.msra.mxu0 0
        %1410 = vmatprep.subr.bf16.mxu0 0
        %1411 = vmatpush1.bf16.msra.mxu0 0
        %1412 = vmatprep.subr.bf16.mxu0 0
        %1413 = vmatpush1.bf16.msra.mxu0 0
        %1414 = vmatprep.subr.bf16.mxu0 0
        %1415 = vmatpush1.bf16.msra.mxu0 0
        %1416 = vmatprep.subr.bf16.mxu0 0
        %1417 = vmatpush1.bf16.msra.mxu0 0
        %1418 = vmatprep.subr.bf16.mxu0 0
        %1419 = vmatpush1.bf16.msra.mxu0 0
        %1420 = vmatprep.subr.bf16.mxu0 0
        %1421 = vmatpush1.bf16.msra.mxu0 0
        %1422 = vmatprep.subr.bf16.mxu0 0
        %1423 = vmatpush1.bf16.msra.mxu0 0
        %1424 = vmatprep.mubr.bf16.mxu0 0
        %1425 = vmatmul.mubr.bf16.gmra.mrb[0].mxu0 %v1390
        %v1426 = vpop.f32.mrb[0].mxu0
        %v1427 = vadd.f32 %v1375, %v1426
        %v1428 = vpop.f32.mrb[0].mxu0
        %v1429 = vpop.f32.mrb[0].mxu0
        %v1430 = vpop.f32.mrb[0].mxu0
        %1431 = vdwg.mxu0
        %v1432 = vmul.f32 %v1427, 1.702
        %v1433 = vxor.u32 %v1432, 2147483648
        %v1434 = vmul.f32 %v1433, 1.442695
        %v1435 = vpow.pop %v1434
        %v1436 = vadd.f32 %v1435, 1.0
        %v1437 = vrcp.pop %v1436
        %v1438 = vmul.f32 1.0, %v1437
        %v1439 = vmul.f32 %v1427, %v1438
        %v1440 = vpack.c.bf16 %v1439, %v1439
        %v1441 = vld [vmem:[%s15] sm:$0xf]
        %v1442 = vld [vmem:[%s15 + $0x4] sm:$0xf]
        %v1443 = vld [vmem:[%s15 + $0x8] sm:$0xf]
        %v1444 = vld [vmem:[%s15 + $0xc] sm:$0xf]
        %v1445 = vld [vmem:[%s15 + $0x10] sm:$0xf]
        %v1446 = vld [vmem:[%s15 + $0x14] sm:$0xf]
        %v1447 = vld [vmem:[%s15 + $0x18] sm:$0xf]
        %v1448 = vld [vmem:[%s15 + $0x1c] sm:$0xf]
        %v1449 = vld [vmem:[%s15 + $0x20] sm:$0xf]
        %v1450 = vld [vmem:[%s15 + $0x24] sm:$0xf]
        %v1451 = vld [vmem:[%s15 + $0x28] sm:$0xf]
        %v1452 = vld [vmem:[%s15 + $0x2c] sm:$0xf]
        %v1453 = vld [vmem:[%s15 + $0x30] sm:$0xf]
        %v1454 = vld [vmem:[%s15 + $0x34] sm:$0xf]
        %v1455 = vld [vmem:[%s15 + $0x38] sm:$0xf]
        %v1456 = vld [vmem:[%s15 + $0x3c] sm:$0xf]
        %v1457 = vld [vmem:[%s16] sm:$0x1]
        %v1459 = vlaneseq
        %v1460 = vshrl.u32 %v1459, 7
        %v1461 = vsub.s32 0, %v1460
        %v1462 = vrot.slane %v1457, %v1461
        %v1480 = vunpack.c.l.b16 %v1441
        %v1481 = vunpack.c.l.b16 %v1442
        %v1482 = vunpack.c.l.b16 %v1443
        %v1483 = vunpack.c.l.b16 %v1444
        %v1484 = vunpack.c.l.b16 %v1445
        %v1485 = vunpack.c.l.b16 %v1446
        %v1486 = vunpack.c.l.b16 %v1447
        %v1487 = vunpack.c.l.b16 %v1448
        %v1488 = vunpack.c.l.b16 %v1449
        %v1489 = vunpack.c.l.b16 %v1450
        %v1490 = vunpack.c.l.b16 %v1451
        %v1491 = vunpack.c.l.b16 %v1452
        %v1492 = vunpack.c.l.b16 %v1453
        %v1493 = vunpack.c.l.b16 %v1454
        %v1494 = vunpack.c.l.b16 %v1455
        %v1495 = vunpack.c.l.b16 %v1456
        %v1496 = vpack.c.b16 %v1481, %v1480
        %v1497 = vpack.c.b16 %v1483, %v1482
        %v1498 = vpack.c.b16 %v1485, %v1484
        %v1499 = vpack.c.b16 %v1487, %v1486
        %v1500 = vpack.c.b16 %v1489, %v1488
        %v1501 = vpack.c.b16 %v1491, %v1490
        %v1502 = vpack.c.b16 %v1493, %v1492
        %v1503 = vpack.c.b16 %v1495, %v1494
        %1512 = vmatprep.subr.bf16.mxu0 0
        %1513 = vmatpush1.bf16.msra.mxu0 %v1496
        %1514 = vmatprep.subr.bf16.mxu0 0
        %1515 = vmatpush1.bf16.msra.mxu0 %v1497
        %1516 = vmatprep.subr.bf16.mxu0 0
        %1517 = vmatpush1.bf16.msra.mxu0 %v1498
        %1518 = vmatprep.subr.bf16.mxu0 0
        %1519 = vmatpush1.bf16.msra.mxu0 %v1499
        %1520 = vmatprep.subr.bf16.mxu0 0
        %1521 = vmatpush1.bf16.msra.mxu0 %v1500
        %1522 = vmatprep.subr.bf16.mxu0 0
        %1523 = vmatpush1.bf16.msra.mxu0 %v1501
        %1524 = vmatprep.subr.bf16.mxu0 0
        %1525 = vmatpush1.bf16.msra.mxu0 %v1502
        %1526 = vmatprep.subr.bf16.mxu0 0
        %1527 = vmatpush1.bf16.msra.mxu0 %v1503
        %1528 = vmatprep.subr.bf16.mxu0 0
        %1529 = vmatpush1.bf16.msra.mxu0 0
        %1530 = vmatprep.subr.bf16.mxu0 0
        %1531 = vmatpush1.bf16.msra.mxu0 0
        %1532 = vmatprep.subr.bf16.mxu0 0
        %1533 = vmatpush1.bf16.msra.mxu0 0
        %1534 = vmatprep.subr.bf16.mxu0 0
        %1535 = vmatpush1.bf16.msra.mxu0 0
        %1536 = vmatprep.subr.bf16.mxu0 0
        %1537 = vmatpush1.bf16.msra.mxu0 0
        %1538 = vmatprep.subr.bf16.mxu0 0
        %1539 = vmatpush1.bf16.msra.mxu0 0
        %1540 = vmatprep.subr.bf16.mxu0 0
        %1541 = vmatpush1.bf16.msra.mxu0 0
        %1542 = vmatprep.subr.bf16.mxu0 0
        %1543 = vmatpush1.bf16.msra.mxu0 0
        %1544 = vmatprep.mubr.bf16.mxu0 0
        %1545 = vmatmul.mubr.bf16.gmra.mrb[0].mxu0 %v1440
        %v1546 = vpop.f32.mrb[0].mxu0
        %v1547 = vadd.f32 %v1462, %v1546
        %v1548 = vpop.f32.mrb[0].mxu0
        %v1549 = vpop.f32.mrb[0].mxu0
        %v1550 = vpop.f32.mrb[0].mxu0
        %1551 = vdwg.mxu0
        %v1552 = vadd.f32 %v1335, %v1547
        %1553 = vst.msk [vmem:[%s577] sm:$0xff] %vm586, %v1552
        %s1554 = sand.u32 %s403, 1
        %s1555 = scalar_lea.sflag [#allocation4], %s1554
        %s1556 = sand.u32 %s403, 1
        %s1557 = smul.addr %s1556, 8
        %s1558 = scalar_lea.vmem [#allocation8], %s1557
        // Predicated region
        $region101: #{tpu_custom_call.1} parent=87 // pred_check
          %p1559 = pneg %p413
        $region102: #{tpu_custom_call.1} parent=87 // pred_check_branch
          %1561 = sbr.rel (%p1559) target = $region104
        $region103: #{tpu_custom_call.1} parent=87 // pred_region
          %s1563 = ssub.s32 128, 128
          %1564 = vsyncadd %s1555, %s1563
          %s1565 = smul.addr %s33, 128
          %s1566 = scalar_lea.hbm %s17, %s1565
          %s1568 = sshll.u32 %s1558, 4
          %s1569 = int_to_ptr.vmem [resolvable:$true] %s1568
          %1571 = dma.vmem_to_hbm [thread:$0]  %s1569, 128, %s1566, %s1555
        $region104: #{tpu_custom_call.1} parent=87 // pred_fallthru
          _
      $region88: #{tpu_custom_call.1} parent=5 // pred_fallthru
        _
      %p1572 = scmp.le.s32.totalorder 2, %s28
      // Predicated region
      $region105: #{tpu_custom_call.1} parent=5 // pred_check
        %p1573 = pneg %p1572
      $region106: #{tpu_custom_call.1} parent=5 // pred_check_branch
        %1575 = sbr.rel (%p1573) target = $region108
      $region107: #{tpu_custom_call.1} parent=5 // pred_region
        %s1576 = ssub.s32 %s28, 2
        // Predicated region
        $region109: #{tpu_custom_call.1} parent=107 // pred_check
          %p1577 = pneg %p419
        $region110: #{tpu_custom_call.1} parent=107 // pred_check_branch
          %1579 = sbr.rel (%p1577) target = $region112
        $region111: #{tpu_custom_call.1} parent=107 // pred_region
          %s1580 = sand.u32 %s404, 1
          %s1581 = scalar_lea.sflag [#allocation4], %s1580
          %s1582 = sand.u32 %s404, 1
          %s1583 = smul.addr %s1582, 8
          %s1584 = scalar_lea.vmem [#allocation8], %s1583
          %1585 = dma.done %s1581, 128
        $region112: #{tpu_custom_call.1} parent=107 // pred_fallthru
          _
      $region108: #{tpu_custom_call.1} parent=5 // pred_fallthru
        _
    $region6: #{tpu_custom_call.1} parent=1 // loop_footer
      %s32 = sadd.s32 1, %s28
    $region7: #{tpu_custom_call.1} parent=1 // loop_footer_branch
      %27 = sbr.rel target = $region3
    $region8: #{tpu_custom_call.1} parent=1 // loop_exit
      _
    %1586 = vsyncpa [#allocation3], 1
    %s1587 = scalar_lea.sflag [#allocation3], 1
    %1588 = vsyncpa %s1587, 1
    %1589 = vsyncpa [#allocation6], 1
    %1590 = vsyncpa [#allocation4], 1
    %s1591 = scalar_lea.sflag [#allocation4], 1
    %1592 = vsyncpa %s1591, 1

</llo_original>
